<compile_context>
chip_gen: v6e
topology: v6e:2x2x1
jax: 0.10.0
libtpu: 0.0.40
codegen_flags: <defaults>
</compile_context>

<pallas_src>
import functools

import jax
import jax.numpy as jnp
from jax.experimental import pallas as pl
from jax.experimental.pallas import tpu as pltpu


# ----------------------------------------------------------------------------
# Fused Pallas kernel (one batch element per grid step)
# ----------------------------------------------------------------------------
def _fused_kernel(x_ref, mask_ref, wc_ref, wr_ref, w1_ref, s1_ref, b1_ref,
                  prew_ref, preb_ref, sww_ref, swb_ref, ws_ref, wl_ref,
                  postw_ref, postb_ref, s2_ref, b2_ref,
                  y_ref, taps_ref, *, H, W, c1, c_, c2, add):
    f32 = jnp.float32
    He, We = H + 6, W + 6
    HW = H * W
    SE = x_ref.shape[-1]                       # lane-padded flattened (He*We)

    taps = [(kh, kw) for kh in range(3) for kw in range(3)]

    def shifted(v, delta):
        # Bring value at flat index P+delta to index P.  For |delta| <= 3*We+3
        # the roll's wrap-around never reaches an interior position, so no
        # per-tap masking is needed (halo/pad zeros provide the conv padding).
        return v if delta == 0 else pltpu.roll(v, (-delta) % SE, axis=1)

    # ---- cv1: 3x3 conv (pad 1, no bias) as ONE fused-K matmul ----------------
    xe = x_ref[...].reshape(c1, SE)            # x on the extended flat domain
    for t, (kh, kw) in enumerate(taps):
        taps_ref[t * c1:(t + 1) * c1, :] = shifted(xe, (kh - 1) * We + (kw - 1))
    h = jnp.dot(w1_ref[...], taps_ref[0:9 * c1, :], preferred_element_type=f32)
    h = h * s1_ref[...] + b1_ref[...]          # folded BatchNorm
    h = h * jax.nn.sigmoid(h)                  # SiLU

    # ---- pre-context: interior mean -> 1x1 conv -> broadcast add -------------
    mask = mask_ref[...]                       # (1, SE) interior indicator
    mean_h = jnp.sum(h * mask, axis=1, keepdims=True) * (1.0 / HW)     # (c_, 1)
    pre = jnp.dot(prew_ref[...], mean_h, preferred_element_type=f32) + preb_ref[...]
    hp = (h + pre) * mask                      # zero halo == conv zero padding

    # ---- switch: 1x1 channel projection + separable 5x5 reflect avg-pool -----
    sp = jnp.sum(hp * sww_ref[...], axis=0, keepdims=True)             # (1, SE)
    colp = None
    for di in range(5):                        # column pass (tap offsets -2..2)
        term = wc_ref[di:di + 1, :] * shifted(sp, di - 2)
        colp = term if colp is None else colp + term
    pooled = None
    for di in range(5):                        # row pass (offsets -2We..2We)
        term = wr_ref[di:di + 1, :] * shifted(colp, (di - 2) * We)
        pooled = term if pooled is None else pooled + term
    sw = pooled * (1.0 / 25.0) + swb_ref[...]                          # (1, SE)

    # ---- SAConv dual-dilation 3x3 convs (shared rolled-tap slab, 2 matmuls) --
    for t, (kh, kw) in enumerate(taps):
        d = (kh - 1) * We + (kw - 1)
        taps_ref[t * c_:(t + 1) * c_, :] = shifted(hp, d)              # dil 1
        taps_ref[9 * c_ + t * c_:9 * c_ + (t + 1) * c_, :] = shifted(hp, 3 * d)
    out_s = jnp.dot(ws_ref[...], taps_ref[0:9 * c_, :],
                    preferred_element_type=f32)
    out_l = jnp.dot(wl_ref[...], taps_ref[9 * c_:18 * c_, :],
                    preferred_element_type=f32)
    out = sw * out_s + (1.0 - sw) * out_l      # blend (no sigmoid, per module)

    # ---- post-context + BatchNorm + SiLU (+ residual) -------------------------
    mean_o = jnp.sum(out * mask, axis=1, keepdims=True) * (1.0 / HW)   # (c2, 1)
    post = jnp.dot(postw_ref[...], mean_o, preferred_element_type=f32) + postb_ref[...]
    out = out + post
    out = out * s2_ref[...] + b2_ref[...]
    out = out * jax.nn.sigmoid(out)            # SiLU
    if add:
        out = out + xe                          # residual (c1 == c2)
    y_ref[...] = out.reshape(1, c2, SE).astype(y_ref.dtype)


# ----------------------------------------------------------------------------
# Wrapper-side glue (weight prep / tiny constant vectors only)
# ----------------------------------------------------------------------------
def standardize_weight(w, gamma, beta):
    """ConvAWS2d._get_weight: mean-center over (Cin,Kh,Kw), unbiased std, affine."""
    mean = jnp.mean(w, axis=(1, 2, 3), keepdims=True)
    wc = w - mean
    var = jnp.var(wc.reshape(w.shape[0], -1), axis=1, ddof=1)   # torch.var: unbiased
    std = jnp.sqrt(var + 1e-5).reshape(-1, 1, 1, 1)
    return gamma * (wc / std) + beta


def bottleneck_saconv(x_nchw, p, *, shortcut=True):
    N, c1, H, W = x_nchw.shape
    c2 = p['sa_w'].shape[0]
    c_ = p['cv1_w'].shape[0]
    add = shortcut and (c1 == c2)
    assert H >= 3 and W >= 3, "reflect pad of 2 requires spatial dims >= 3"

    He, We = H + 6, W + 6
    HeWe = He * We
    SE = ((HeWe + 127) // 128) * 128            # lane-padded flat length
    HW = H * W
    f32 = jnp.float32

    x = x_nchw.astype(f32)

    # x embedded in the extended (halo-3) domain, channels-first, flat, lane-padded.
    xe = jnp.pad(x, ((0, 0), (0, 0), (3, 3), (3, 3))).reshape(N, c1, HeWe)
    xe = jnp.pad(xe, ((0, 0), (0, 0), (0, SE - HeWe)))

    # interior-indicator row vector on the extended flat layout
    rows = jnp.arange(HeWe) // We
    cols = jnp.arange(HeWe) % We
    interior = ((rows >= 3) & (rows < H + 3) & (cols >= 3) & (cols < W + 3))
    mask = jnp.pad(interior.astype(f32), (0, SE - HeWe)).reshape(1, SE)

    # per-column / per-row coefficients of the separable 5-tap reflect box filter
    def reflect_coeffs(L):
        c = jnp.ones((5, L), f32)               # rows: tap offsets d = -2..+2
        c = c.at[0, L - 1].add(1.0)             # d=-2 doubled at j=L-1
        c = c.at[1, L - 1].add(1.0)             # d=-1 doubled at j=L-1
        c = c.at[2, 1].add(1.0)                 # d= 0 doubled at j=1
        c = c.at[2, L - 2].add(1.0)             # d= 0 doubled at j=L-2
        c = c.at[3, 0].add(1.0)                 # d=+1 doubled at j=0
        c = c.at[4, 0].add(1.0)                 # d=+2 doubled at j=0
        return c

    wc = jnp.zeros((5, We), f32).at[:, 3:W + 3].set(reflect_coeffs(W))
    wc = jnp.pad(jnp.tile(wc, (1, He)), ((0, 0), (0, SE - HeWe)))       # f(col(P))
    wr = jnp.zeros((5, He), f32).at[:, 3:H + 3].set(reflect_coeffs(H))
    wr = jnp.pad(jnp.repeat(wr, We, axis=1), ((0, 0), (0, SE - HeWe)))  # f(row(P))

    # fold BatchNorm (inference, running stats) into per-channel scale/bias
    s1 = p['cv1_bn_g'] / jnp.sqrt(p['cv1_bn_rv'] + 1e-5)
    b1 = p['cv1_bn_b'] - p['cv1_bn_rm'] * s1
    s2 = p['sa_bn_g'] / jnp.sqrt(p['sa_bn_rv'] + 1e-5)
    b2 = p['sa_bn_b'] - p['sa_bn_rm'] * s2

    # conv weights as (Cout, 9*Cin) matrices matching the in-kernel tap-slab order
    def tapmat(w):
        co, ci = w.shape[0], w.shape[1]
        return jnp.transpose(w, (0, 2, 3, 1)).reshape(co, 9 * ci)

    w1m = tapmat(p['cv1_w'])                                            # (c_, 9*c1)
    wstd = standardize_weight(p['sa_w'], p['sa_wgamma'], p['sa_wbeta'])
    wsm = tapmat(wstd)                                                  # (c2, 9*c_)
    wlm = tapmat(wstd + p['sa_wdiff'])
    # NOTE: SAConv2d calls _conv_forward(..., bias=None), so the conv bias is unused.
    # TODO(synk): feed the three conv matmuls bf16 operands (f32 accumulation) for
    #             MXU-native rate; kept f32 here for exact PyTorch parity.

    ins = [
        xe,                                        # (N, c1, SE)
        mask, wc, wr,                              # (1|5, SE)
        w1m,
        s1.reshape(c_, 1), b1.reshape(c_, 1),
        p['pre_w'].reshape(c_, c_), p['pre_b'].reshape(c_, 1),
        p['sw_w'].reshape(c_, 1), p['sw_b'].reshape(1, 1),
        wsm, wlm,
        p['post_w'].reshape(c2, c2), p['post_b'].reshape(c2, 1),
        s2.reshape(c2, 1), b2.reshape(c2, 1),
    ]

    def const_spec(a):
        r = len(a.shape)
        return pl.BlockSpec(a.shape, lambda n, _r=r: (0,) * _r)

    in_specs = [pl.BlockSpec((1, c1, SE), lambda n: (n, 0, 0))]
    in_specs += [const_spec(a) for a in ins[1:]]

    slab_rows = max(9 * c1, 18 * c_)
    flops = 2 * N * SE * (9 * c1 * c_ + 18 * c_ * c2 + 3 * (c_ + c2))
    bytes_accessed = 4 * (N * c1 * SE + N * c2 * SE
                          + sum(int(a.size) for a in ins[1:]))
    cost = pl.CostEstimate(flops=int(flops),
                           transcendentals=int(N * SE * (c_ + c2)),
                           bytes_accessed=int(bytes_accessed))

    kernel = functools.partial(_fused_kernel, H=H, W=W, c1=c1, c_=c_, c2=c2,
                               add=add)
    # TODO(synk): for large N, fold ceil(N / (2 * steps)) images into the lane axis
    #             per grid step (keep >= 2 "parallel" steps so both v7x TCs get work).
    y_flat = pl.pallas_call(
        kernel,
        out_shape=jax.ShapeDtypeStruct((N, c2, SE), f32),
        grid_spec=pltpu.PrefetchScalarGridSpec(
            num_scalar_prefetch=0,
            grid=(N,),
            in_specs=in_specs,
            out_specs=pl.BlockSpec((1, c2, SE), lambda n: (n, 0, 0)),
            scratch_shapes=[pltpu.VMEM((slab_rows, SE), f32)]),
        compiler_params=pltpu.CompilerParams(
            dimension_semantics=("parallel",),
            vmem_limit_bytes=32 * 1024 * 1024),
        cost_estimate=cost,
    )(*ins)

    # lane-dense kernel output slab -> NCHW (cheap XLA reshape/slice in the wrapper)
    y = y_flat[:, :, :HeWe].reshape(N, c2, He, We)[:, :, 3:H + 3, 3:W + 3]
    return y


# ----------------------------------------------------------------------------
# Deterministic parameter initialization (shapes from Bottleneck_SAConv.__init__)
# ----------------------------------------------------------------------------
def init_params(key, c1, c2, c_):
    ks = jax.random.split(key, 20)

    def rnd(k, shape, scale=0.1):
        return scale * jax.random.normal(k, shape, jnp.float32)

    p = {}
    # cv1 = Conv(c1, c_, 3): conv weight (no bias) + BatchNorm2d
    p['cv1_w'] = rnd(ks[0], (c_, c1, 3, 3))
    p['cv1_bn_g'] = 1.0 + rnd(ks[1], (c_,))
    p['cv1_bn_b'] = rnd(ks[2], (c_,))
    p['cv1_bn_rm'] = rnd(ks[3], (c_,))
    p['cv1_bn_rv'] = 1.0 + 0.1 * jnp.abs(jax.random.normal(ks[4], (c_,), jnp.float32))
    # cv2 = SAConv2d(c_, c2, 3, 1)
    p['sa_w'] = rnd(ks[5], (c2, c_, 3, 3))          # conv bias exists but is unused
    p['sa_wgamma'] = jnp.ones((c2, 1, 1, 1), jnp.float32)
    p['sa_wbeta'] = jnp.zeros((c2, 1, 1, 1), jnp.float32)
    p['sa_wdiff'] = rnd(ks[6], (c2, c_, 3, 3), 0.05)
    p['sw_w'] = rnd(ks[7], (1, c_, 1, 1))
    p['sw_b'] = 1.0 + rnd(ks[8], (1,))
    p['pre_w'] = rnd(ks[9], (c_, c_, 1, 1))
    p['pre_b'] = rnd(ks[10], (c_,))
    p['post_w'] = rnd(ks[11], (c2, c2, 1, 1))
    p['post_b'] = rnd(ks[12], (c2,))
    p['sa_bn_g'] = 1.0 + rnd(ks[13], (c2,))
    p['sa_bn_b'] = rnd(ks[14], (c2,))
    p['sa_bn_rm'] = rnd(ks[15], (c2,))
    p['sa_bn_rv'] = 1.0 + 0.1 * jnp.abs(jax.random.normal(ks[16], (c2,), jnp.float32))
    return p


if __name__ == "__main__":
    key = jax.random.PRNGKey(0)
    kx, kp = jax.random.split(key)

    # Bottleneck_SAConv(c1=8, c2=8, shortcut=True, e=0.5) -> c_ = 4
    N, c1, c2, H, W = 2, 8, 8, 16, 16
    c_ = int(c2 * 0.5)

    x = jax.random.normal(kx, (N, c1, H, W), jnp.float32)   # NCHW (PyTorch convention)
    params = init_params(kp, c1, c2, c_)

    fwd = jax.jit(functools.partial(bottleneck_saconv, shortcut=True))
    y = fwd(x, params)
    jax.block_until_ready(y)
    assert y.shape == (N, c2, H, W) and y.dtype == jnp.float32
    print("KERNEL_OK")
</pallas_src>

<mosaic_0001>
module attributes {stable_mosaic.version = 11 : i64} {
  func.func @_fused_kernel(%arg0: i32, %arg1: memref<1x8x512xf32, #tpu.memory_space<vmem>>, %arg2: memref<1x512xf32, #tpu.memory_space<vmem>>, %arg3: memref<5x512xf32, #tpu.memory_space<vmem>>, %arg4: memref<5x512xf32, #tpu.memory_space<vmem>>, %arg5: memref<4x72xf32, #tpu.memory_space<vmem>>, %arg6: memref<4x1xf32, #tpu.memory_space<vmem>>, %arg7: memref<4x1xf32, #tpu.memory_space<vmem>>, %arg8: memref<4x4xf32, #tpu.memory_space<vmem>>, %arg9: memref<4x1xf32, #tpu.memory_space<vmem>>, %arg10: memref<4x1xf32, #tpu.memory_space<vmem>>, %arg11: memref<1x1xf32, #tpu.memory_space<vmem>>, %arg12: memref<8x36xf32, #tpu.memory_space<vmem>>, %arg13: memref<8x36xf32, #tpu.memory_space<vmem>>, %arg14: memref<8x8xf32, #tpu.memory_space<vmem>>, %arg15: memref<8x1xf32, #tpu.memory_space<vmem>>, %arg16: memref<8x1xf32, #tpu.memory_space<vmem>>, %arg17: memref<8x1xf32, #tpu.memory_space<vmem>>, %arg18: memref<1x8x512xf32, #tpu.memory_space<vmem>>, %arg19: memref<72x512xf32, #tpu.memory_space<vmem>>) attributes {dimension_semantics = [#tpu.dimension_semantics<parallel>], iteration_bounds = array<i64: 2>, scalar_prefetch = 0 : i64, scratch_operands = 1 : i64, tpu.core_type = #tpu.core_type<tc>, window_params = [{transform_indices = @transform_0, window_bounds = array<i64: 1, 8, 512>}, {pipeline_mode = #tpu.pipeline_mode<synchronous>, transform_indices = @transform_1, window_bounds = array<i64: 1, 512>}, {pipeline_mode = #tpu.pipeline_mode<synchronous>, transform_indices = @transform_2, window_bounds = array<i64: 5, 512>}, {pipeline_mode = #tpu.pipeline_mode<synchronous>, transform_indices = @transform_3, window_bounds = array<i64: 5, 512>}, {pipeline_mode = #tpu.pipeline_mode<synchronous>, transform_indices = @transform_4, window_bounds = array<i64: 4, 72>}, {pipeline_mode = #tpu.pipeline_mode<synchronous>, transform_indices = @transform_5, window_bounds = array<i64: 4, 1>}, {pipeline_mode = #tpu.pipeline_mode<synchronous>, transform_indices = @transform_6, window_bounds = array<i64: 4, 1>}, {pipeline_mode = #tpu.pipeline_mode<synchronous>, transform_indices = @transform_7, window_bounds = array<i64: 4, 4>}, {pipeline_mode = #tpu.pipeline_mode<synchronous>, transform_indices = @transform_8, window_bounds = array<i64: 4, 1>}, {pipeline_mode = #tpu.pipeline_mode<synchronous>, transform_indices = @transform_9, window_bounds = array<i64: 4, 1>}, {pipeline_mode = #tpu.pipeline_mode<synchronous>, transform_indices = @transform_10, window_bounds = array<i64: 1, 1>}, {pipeline_mode = #tpu.pipeline_mode<synchronous>, transform_indices = @transform_11, window_bounds = array<i64: 8, 36>}, {pipeline_mode = #tpu.pipeline_mode<synchronous>, transform_indices = @transform_12, window_bounds = array<i64: 8, 36>}, {pipeline_mode = #tpu.pipeline_mode<synchronous>, transform_indices = @transform_13, window_bounds = array<i64: 8, 8>}, {pipeline_mode = #tpu.pipeline_mode<synchronous>, transform_indices = @transform_14, window_bounds = array<i64: 8, 1>}, {pipeline_mode = #tpu.pipeline_mode<synchronous>, transform_indices = @transform_15, window_bounds = array<i64: 8, 1>}, {pipeline_mode = #tpu.pipeline_mode<synchronous>, transform_indices = @transform_16, window_bounds = array<i64: 8, 1>}, {transform_indices = @transform_17, window_bounds = array<i64: 1, 8, 512>}]} {
    %c0 = arith.constant 0 : index
    %c0_0 = arith.constant 0 : index
    %c0_1 = arith.constant 0 : index
    %0 = vector.load %arg1[%c0, %c0_0, %c0_1] : memref<1x8x512xf32, #tpu.memory_space<vmem>>, vector<1x8x512xf32>
    %1 = vector.shape_cast %0 : vector<1x8x512xf32> to vector<8x512xf32>
    %c23_i32 = arith.constant 23 : i32
    %2 = tpu.dynamic_rotate %1 by %c23_i32 dim 1 : vector<8x512xf32>, i32 -> vector<8x512xf32>
    %c0_2 = arith.constant 0 : index
    %c0_3 = arith.constant 0 : index
    %3 = vector.load %arg19[%c0_2, %c0_3] : memref<72x512xf32, #tpu.memory_space<vmem>>, vector<8x512xf32>
    tpu.vector_store %arg19[%c0_2, %c0_3], %2 {strides = array<i32>} : memref<72x512xf32, #tpu.memory_space<vmem>>, vector<8x512xf32>,
    %c22_i32 = arith.constant 22 : i32
    %4 = tpu.dynamic_rotate %1 by %c22_i32 dim 1 : vector<8x512xf32>, i32 -> vector<8x512xf32>
    %c8 = arith.constant 8 : index
    %c0_4 = arith.constant 0 : index
    %5 = vector.load %arg19[%c8, %c0_4] : memref<72x512xf32, #tpu.memory_space<vmem>>, vector<8x512xf32>
    tpu.vector_store %arg19[%c8, %c0_4], %4 {strides = array<i32>} : memref<72x512xf32, #tpu.memory_space<vmem>>, vector<8x512xf32>,
    %c21_i32 = arith.constant 21 : i32
    %6 = tpu.dynamic_rotate %1 by %c21_i32 dim 1 : vector<8x512xf32>, i32 -> vector<8x512xf32>
    %c16 = arith.constant 16 : index
    %c0_5 = arith.constant 0 : index
    %7 = vector.load %arg19[%c16, %c0_5] : memref<72x512xf32, #tpu.memory_space<vmem>>, vector<8x512xf32>
    tpu.vector_store %arg19[%c16, %c0_5], %6 {strides = array<i32>} : memref<72x512xf32, #tpu.memory_space<vmem>>, vector<8x512xf32>,
    %c1_i32 = arith.constant 1 : i32
    %8 = tpu.dynamic_rotate %1 by %c1_i32 dim 1 : vector<8x512xf32>, i32 -> vector<8x512xf32>
    %c24 = arith.constant 24 : index
    %c0_6 = arith.constant 0 : index
    %9 = vector.load %arg19[%c24, %c0_6] : memref<72x512xf32, #tpu.memory_space<vmem>>, vector<8x512xf32>
    tpu.vector_store %arg19[%c24, %c0_6], %8 {strides = array<i32>} : memref<72x512xf32, #tpu.memory_space<vmem>>, vector<8x512xf32>,
    %c32 = arith.constant 32 : index
    %c0_7 = arith.constant 0 : index
    %10 = vector.load %arg19[%c32, %c0_7] : memref<72x512xf32, #tpu.memory_space<vmem>>, vector<8x512xf32>
    tpu.vector_store %arg19[%c32, %c0_7], %1 {strides = array<i32>} : memref<72x512xf32, #tpu.memory_space<vmem>>, vector<8x512xf32>,
    %c511_i32 = arith.constant 511 : i32
    %11 = tpu.dynamic_rotate %1 by %c511_i32 dim 1 : vector<8x512xf32>, i32 -> vector<8x512xf32>
    %c40 = arith.constant 40 : index
    %c0_8 = arith.constant 0 : index
    %12 = vector.load %arg19[%c40, %c0_8] : memref<72x512xf32, #tpu.memory_space<vmem>>, vector<8x512xf32>
    tpu.vector_store %arg19[%c40, %c0_8], %11 {strides = array<i32>} : memref<72x512xf32, #tpu.memory_space<vmem>>, vector<8x512xf32>,
    %c491_i32 = arith.constant 491 : i32
    %13 = tpu.dynamic_rotate %1 by %c491_i32 dim 1 : vector<8x512xf32>, i32 -> vector<8x512xf32>
    %c48 = arith.constant 48 : index
    %c0_9 = arith.constant 0 : index
    %14 = vector.load %arg19[%c48, %c0_9] : memref<72x512xf32, #tpu.memory_space<vmem>>, vector<8x512xf32>
    tpu.vector_store %arg19[%c48, %c0_9], %13 {strides = array<i32>} : memref<72x512xf32, #tpu.memory_space<vmem>>, vector<8x512xf32>,
    %c490_i32 = arith.constant 490 : i32
    %15 = tpu.dynamic_rotate %1 by %c490_i32 dim 1 : vector<8x512xf32>, i32 -> vector<8x512xf32>
    %c56 = arith.constant 56 : index
    %c0_10 = arith.constant 0 : index
    %16 = vector.load %arg19[%c56, %c0_10] : memref<72x512xf32, #tpu.memory_space<vmem>>, vector<8x512xf32>
    tpu.vector_store %arg19[%c56, %c0_10], %15 {strides = array<i32>} : memref<72x512xf32, #tpu.memory_space<vmem>>, vector<8x512xf32>,
    %c489_i32 = arith.constant 489 : i32
    %17 = tpu.dynamic_rotate %1 by %c489_i32 dim 1 : vector<8x512xf32>, i32 -> vector<8x512xf32>
    %c64 = arith.constant 64 : index
    %c0_11 = arith.constant 0 : index
    %18 = vector.load %arg19[%c64, %c0_11] : memref<72x512xf32, #tpu.memory_space<vmem>>, vector<8x512xf32>
    tpu.vector_store %arg19[%c64, %c0_11], %17 {strides = array<i32>} : memref<72x512xf32, #tpu.memory_space<vmem>>, vector<8x512xf32>,
    %c0_12 = arith.constant 0 : index
    %c0_13 = arith.constant 0 : index
    %19 = vector.load %arg5[%c0_12, %c0_13] : memref<4x72xf32, #tpu.memory_space<vmem>>, vector<4x72xf32>
    %c0_14 = arith.constant 0 : index
    %c0_15 = arith.constant 0 : index
    %20 = vector.load %arg19[%c0_14, %c0_15] : memref<72x512xf32, #tpu.memory_space<vmem>>, vector<72x512xf32>
    %cst = arith.constant dense<0.000000e+00> : vector<4x512xf32>
    %21 = tpu.matmul %19, %20, %cst {dimension_numbers = #tpu.dot_dimension_numbers<[1], [0], [0], [1], [0, 0, 1, 1], [], []>} : vector<4x72xf32>, vector<72x512xf32>, vector<4x512xf32> -> vector<4x512xf32>
    %c0_16 = arith.constant 0 : index
    %c0_17 = arith.constant 0 : index
    %22 = vector.load %arg6[%c0_16, %c0_17] : memref<4x1xf32, #tpu.memory_space<vmem>>, vector<4x1xf32>
    %23 = vector.broadcast %22 : vector<4x1xf32> to vector<4x512xf32>
    %24 = arith.mulf %21, %23 : vector<4x512xf32>
    %c0_18 = arith.constant 0 : index
    %c0_19 = arith.constant 0 : index
    %25 = vector.load %arg7[%c0_18, %c0_19] : memref<4x1xf32, #tpu.memory_space<vmem>>, vector<4x1xf32>
    %26 = vector.broadcast %25 : vector<4x1xf32> to vector<4x512xf32>
    %27 = arith.addf %24, %26 : vector<4x512xf32>
    %28 = arith.negf %27 : vector<4x512xf32>
    %29 = math.exp %28 : vector<4x512xf32>
    %cst_20 = arith.constant 1.000000e+00 : f32
    %30 = vector.broadcast %cst_20 : f32 to vector<4x512xf32>
    %31 = arith.addf %30, %29 : vector<4x512xf32>
    %32 = arith.divf %30, %31 : vector<4x512xf32>
    %33 = arith.mulf %27, %32 : vector<4x512xf32>
    %c0_21 = arith.constant 0 : index
    %c0_22 = arith.constant 0 : index
    %34 = vector.load %arg2[%c0_21, %c0_22] : memref<1x512xf32, #tpu.memory_space<vmem>>, vector<1x512xf32>
    %35 = vector.broadcast %34 : vector<1x512xf32> to vector<4x512xf32>
    %36 = arith.mulf %33, %35 : vector<4x512xf32>
    %cst_23 = arith.constant dense<0.000000e+00> : vector<4xf32>
    %37 = vector.multi_reduction <add>, %36, %cst_23 [1] : vector<4x512xf32> to vector<4xf32>
    %38 = vector.shape_cast %37 : vector<4xf32> to vector<4x1xf32>
    %cst_24 = arith.constant 3.906250e-03 : f32
    %39 = vector.broadcast %cst_24 : f32 to vector<4x1xf32>
    %40 = arith.mulf %38, %39 : vector<4x1xf32>
    %c0_25 = arith.constant 0 : index
    %c0_26 = arith.constant 0 : index
    %41 = vector.load %arg8[%c0_25, %c0_26] : memref<4x4xf32, #tpu.memory_space<vmem>>, vector<4x4xf32>
    %cst_27 = arith.constant dense<0.000000e+00> : vector<4x1xf32>
    %42 = tpu.matmul %41, %40, %cst_27 {dimension_numbers = #tpu.dot_dimension_numbers<[1], [0], [0], [1], [0, 0, 1, 1], [], []>} : vector<4x4xf32>, vector<4x1xf32>, vector<4x1xf32> -> vector<4x1xf32>
    %c0_28 = arith.constant 0 : index
    %c0_29 = arith.constant 0 : index
    %43 = vector.load %arg9[%c0_28, %c0_29] : memref<4x1xf32, #tpu.memory_space<vmem>>, vector<4x1xf32>
    %44 = arith.addf %42, %43 : vector<4x1xf32>
    %45 = vector.broadcast %44 : vector<4x1xf32> to vector<4x512xf32>
    %46 = arith.addf %33, %45 : vector<4x512xf32>
    %47 = vector.broadcast %34 : vector<1x512xf32> to vector<4x512xf32>
    %48 = arith.mulf %46, %47 : vector<4x512xf32>
    %c0_30 = arith.constant 0 : index
    %c0_31 = arith.constant 0 : index
    %49 = vector.load %arg10[%c0_30, %c0_31] : memref<4x1xf32, #tpu.memory_space<vmem>>, vector<4x1xf32>
    %50 = vector.broadcast %49 : vector<4x1xf32> to vector<4x512xf32>
    %51 = arith.mulf %48, %50 : vector<4x512xf32>
    %cst_32 = arith.constant dense<0.000000e+00> : vector<512xf32>
    %52 = vector.multi_reduction <add>, %51, %cst_32 [0] : vector<4x512xf32> to vector<512xf32>
    %53 = vector.shape_cast %52 : vector<512xf32> to vector<1x512xf32>
    %c0_33 = arith.constant 0 : index
    %c0_34 = arith.constant 0 : index
    %54 = vector.load %arg3[%c0_33, %c0_34] : memref<5x512xf32, #tpu.memory_space<vmem>>, vector<1x512xf32>
    %c2_i32 = arith.constant 2 : i32
    %55 = tpu.dynamic_rotate %53 by %c2_i32 dim 1 : vector<1x512xf32>, i32 -> vector<1x512xf32>
    %56 = arith.mulf %54, %55 : vector<1x512xf32>
    %c1 = arith.constant 1 : index
    %c0_35 = arith.constant 0 : index
    %57 = vector.load %arg3[%c1, %c0_35] : memref<5x512xf32, #tpu.memory_space<vmem>>, vector<1x512xf32>
    %c1_i32_36 = arith.constant 1 : i32
    %58 = tpu.dynamic_rotate %53 by %c1_i32_36 dim 1 : vector<1x512xf32>, i32 -> vector<1x512xf32>
    %59 = arith.mulf %57, %58 : vector<1x512xf32>
    %60 = arith.addf %56, %59 : vector<1x512xf32>
    %c2 = arith.constant 2 : index
    %c0_37 = arith.constant 0 : index
    %61 = vector.load %arg3[%c2, %c0_37] : memref<5x512xf32, #tpu.memory_space<vmem>>, vector<1x512xf32>
    %62 = arith.mulf %61, %53 : vector<1x512xf32>
    %63 = arith.addf %60, %62 : vector<1x512xf32>
    %c3 = arith.constant 3 : index
    %c0_38 = arith.constant 0 : index
    %64 = vector.load %arg3[%c3, %c0_38] : memref<5x512xf32, #tpu.memory_space<vmem>>, vector<1x512xf32>
    %c511_i32_39 = arith.constant 511 : i32
    %65 = tpu.dynamic_rotate %53 by %c511_i32_39 dim 1 : vector<1x512xf32>, i32 -> vector<1x512xf32>
    %66 = arith.mulf %64, %65 : vector<1x512xf32>
    %67 = arith.addf %63, %66 : vector<1x512xf32>
    %c4 = arith.constant 4 : index
    %c0_40 = arith.constant 0 : index
    %68 = vector.load %arg3[%c4, %c0_40] : memref<5x512xf32, #tpu.memory_space<vmem>>, vector<1x512xf32>
    %c510_i32 = arith.constant 510 : i32
    %69 = tpu.dynamic_rotate %53 by %c510_i32 dim 1 : vector<1x512xf32>, i32 -> vector<1x512xf32>
    %70 = arith.mulf %68, %69 : vector<1x512xf32>
    %71 = arith.addf %67, %70 : vector<1x512xf32>
    %c0_41 = arith.constant 0 : index
    %c0_42 = arith.constant 0 : index
    %72 = vector.load %arg4[%c0_41, %c0_42] : memref<5x512xf32, #tpu.memory_space<vmem>>, vector<1x512xf32>
    %c44_i32 = arith.constant 44 : i32
    %73 = tpu.dynamic_rotate %71 by %c44_i32 dim 1 : vector<1x512xf32>, i32 -> vector<1x512xf32>
    %74 = arith.mulf %72, %73 : vector<1x512xf32>
    %c1_43 = arith.constant 1 : index
    %c0_44 = arith.constant 0 : index
    %75 = vector.load %arg4[%c1_43, %c0_44] : memref<5x512xf32, #tpu.memory_space<vmem>>, vector<1x512xf32>
    %c22_i32_45 = arith.constant 22 : i32
    %76 = tpu.dynamic_rotate %71 by %c22_i32_45 dim 1 : vector<1x512xf32>, i32 -> vector<1x512xf32>
    %77 = arith.mulf %75, %76 : vector<1x512xf32>
    %78 = arith.addf %74, %77 : vector<1x512xf32>
    %c2_46 = arith.constant 2 : index
    %c0_47 = arith.constant 0 : index
    %79 = vector.load %arg4[%c2_46, %c0_47] : memref<5x512xf32, #tpu.memory_space<vmem>>, vector<1x512xf32>
    %80 = arith.mulf %79, %71 : vector<1x512xf32>
    %81 = arith.addf %78, %80 : vector<1x512xf32>
    %c3_48 = arith.constant 3 : index
    %c0_49 = arith.constant 0 : index
    %82 = vector.load %arg4[%c3_48, %c0_49] : memref<5x512xf32, #tpu.memory_space<vmem>>, vector<1x512xf32>
    %c490_i32_50 = arith.constant 490 : i32
    %83 = tpu.dynamic_rotate %71 by %c490_i32_50 dim 1 : vector<1x512xf32>, i32 -> vector<1x512xf32>
    %84 = arith.mulf %82, %83 : vector<1x512xf32>
    %85 = arith.addf %81, %84 : vector<1x512xf32>
    %c4_51 = arith.constant 4 : index
    %c0_52 = arith.constant 0 : index
    %86 = vector.load %arg4[%c4_51, %c0_52] : memref<5x512xf32, #tpu.memory_space<vmem>>, vector<1x512xf32>
    %c468_i32 = arith.constant 468 : i32
    %87 = tpu.dynamic_rotate %71 by %c468_i32 dim 1 : vector<1x512xf32>, i32 -> vector<1x512xf32>
    %88 = arith.mulf %86, %87 : vector<1x512xf32>
    %89 = arith.addf %85, %88 : vector<1x512xf32>
    %cst_53 = arith.constant 4.000000e-02 : f32
    %90 = vector.broadcast %cst_53 : f32 to vector<1x512xf32>
    %91 = arith.mulf %89, %90 : vector<1x512xf32>
    %c0_54 = arith.constant 0 : index
    %c0_55 = arith.constant 0 : index
    %92 = vector.load %arg11[%c0_54, %c0_55] : memref<1x1xf32, #tpu.memory_space<vmem>>, vector<1x1xf32>
    %93 = vector.broadcast %92 : vector<1x1xf32> to vector<1x512xf32>
    %94 = arith.addf %91, %93 : vector<1x512xf32>
    %c23_i32_56 = arith.constant 23 : i32
    %95 = tpu.dynamic_rotate %48 by %c23_i32_56 dim 1 : vector<4x512xf32>, i32 -> vector<4x512xf32>
    %c0_57 = arith.constant 0 : index
    %c0_58 = arith.constant 0 : index
    %96 = vector.load %arg19[%c0_57, %c0_58] : memref<72x512xf32, #tpu.memory_space<vmem>>, vector<4x512xf32>
    tpu.vector_store %arg19[%c0_57, %c0_58], %95 {strides = array<i32>} : memref<72x512xf32, #tpu.memory_space<vmem>>, vector<4x512xf32>,
    %c69_i32 = arith.constant 69 : i32
    %97 = tpu.dynamic_rotate %48 by %c69_i32 dim 1 : vector<4x512xf32>, i32 -> vector<4x512xf32>
    %c36 = arith.constant 36 : index
    %c0_59 = arith.constant 0 : index
    %98 = vector.load %arg19[%c36, %c0_59] : memref<72x512xf32, #tpu.memory_space<vmem>>, vector<4x512xf32>
    tpu.vector_store %arg19[%c36, %c0_59], %97 {strides = array<i32>} : memref<72x512xf32, #tpu.memory_space<vmem>>, vector<4x512xf32>,
    %c22_i32_60 = arith.constant 22 : i32
    %99 = tpu.dynamic_rotate %48 by %c22_i32_60 dim 1 : vector<4x512xf32>, i32 -> vector<4x512xf32>
    %c4_61 = arith.constant 4 : index
    %c0_62 = arith.constant 0 : index
    %100 = vector.load %arg19[%c4_61, %c0_62] : memref<72x512xf32, #tpu.memory_space<vmem>>, vector<4x512xf32>
    tpu.vector_store %arg19[%c4_61, %c0_62], %99 {strides = array<i32>} : memref<72x512xf32, #tpu.memory_space<vmem>>, vector<4x512xf32>,
    %c66_i32 = arith.constant 66 : i32
    %101 = tpu.dynamic_rotate %48 by %c66_i32 dim 1 : vector<4x512xf32>, i32 -> vector<4x512xf32>
    %c40_63 = arith.constant 40 : index
    %c0_64 = arith.constant 0 : index
    %102 = vector.load %arg19[%c40_63, %c0_64] : memref<72x512xf32, #tpu.memory_space<vmem>>, vector<4x512xf32>
    tpu.vector_store %arg19[%c40_63, %c0_64], %101 {strides = array<i32>} : memref<72x512xf32, #tpu.memory_space<vmem>>, vector<4x512xf32>,
    %c21_i32_65 = arith.constant 21 : i32
    %103 = tpu.dynamic_rotate %48 by %c21_i32_65 dim 1 : vector<4x512xf32>, i32 -> vector<4x512xf32>
    %c8_66 = arith.constant 8 : index
    %c0_67 = arith.constant 0 : index
    %104 = vector.load %arg19[%c8_66, %c0_67] : memref<72x512xf32, #tpu.memory_space<vmem>>, vector<4x512xf32>
    tpu.vector_store %arg19[%c8_66, %c0_67], %103 {strides = array<i32>} : memref<72x512xf32, #tpu.memory_space<vmem>>, vector<4x512xf32>,
    %c63_i32 = arith.constant 63 : i32
    %105 = tpu.dynamic_rotate %48 by %c63_i32 dim 1 : vector<4x512xf32>, i32 -> vector<4x512xf32>
    %c44 = arith.constant 44 : index
    %c0_68 = arith.constant 0 : index
    %106 = vector.load %arg19[%c44, %c0_68] : memref<72x512xf32, #tpu.memory_space<vmem>>, vector<4x512xf32>
    tpu.vector_store %arg19[%c44, %c0_68], %105 {strides = array<i32>} : memref<72x512xf32, #tpu.memory_space<vmem>>, vector<4x512xf32>,
    %c1_i32_69 = arith.constant 1 : i32
    %107 = tpu.dynamic_rotate %48 by %c1_i32_69 dim 1 : vector<4x512xf32>, i32 -> vector<4x512xf32>
    %c12 = arith.constant 12 : index
    %c0_70 = arith.constant 0 : index
    %108 = vector.load %arg19[%c12, %c0_70] : memref<72x512xf32, #tpu.memory_space<vmem>>, vector<4x512xf32>
    tpu.vector_store %arg19[%c12, %c0_70], %107 {strides = array<i32>} : memref<72x512xf32, #tpu.memory_space<vmem>>, vector<4x512xf32>,
    %c3_i32 = arith.constant 3 : i32
    %109 = tpu.dynamic_rotate %48 by %c3_i32 dim 1 : vector<4x512xf32>, i32 -> vector<4x512xf32>
    %c48_71 = arith.constant 48 : index
    %c0_72 = arith.constant 0 : index
    %110 = vector.load %arg19[%c48_71, %c0_72] : memref<72x512xf32, #tpu.memory_space<vmem>>, vector<4x512xf32>
    tpu.vector_store %arg19[%c48_71, %c0_72], %109 {strides = array<i32>} : memref<72x512xf32, #tpu.memory_space<vmem>>, vector<4x512xf32>,
    %c16_73 = arith.constant 16 : index
    %c0_74 = arith.constant 0 : index
    %111 = vector.load %arg19[%c16_73, %c0_74] : memref<72x512xf32, #tpu.memory_space<vmem>>, vector<4x512xf32>
    tpu.vector_store %arg19[%c16_73, %c0_74], %48 {strides = array<i32>} : memref<72x512xf32, #tpu.memory_space<vmem>>, vector<4x512xf32>,
    %c52 = arith.constant 52 : index
    %c0_75 = arith.constant 0 : index
    %112 = vector.load %arg19[%c52, %c0_75] : memref<72x512xf32, #tpu.memory_space<vmem>>, vector<4x512xf32>
    tpu.vector_store %arg19[%c52, %c0_75], %48 {strides = array<i32>} : memref<72x512xf32, #tpu.memory_space<vmem>>, vector<4x512xf32>,
    %c511_i32_76 = arith.constant 511 : i32
    %113 = tpu.dynamic_rotate %48 by %c511_i32_76 dim 1 : vector<4x512xf32>, i32 -> vector<4x512xf32>
    %c20 = arith.constant 20 : index
    %c0_77 = arith.constant 0 : index
    %114 = vector.load %arg19[%c20, %c0_77] : memref<72x512xf32, #tpu.memory_space<vmem>>, vector<4x512xf32>
    tpu.vector_store %arg19[%c20, %c0_77], %113 {strides = array<i32>} : memref<72x512xf32, #tpu.memory_space<vmem>>, vector<4x512xf32>,
    %c509_i32 = arith.constant 509 : i32
    %115 = tpu.dynamic_rotate %48 by %c509_i32 dim 1 : vector<4x512xf32>, i32 -> vector<4x512xf32>
    %c56_78 = arith.constant 56 : index
    %c0_79 = arith.constant 0 : index
    %116 = vector.load %arg19[%c56_78, %c0_79] : memref<72x512xf32, #tpu.memory_space<vmem>>, vector<4x512xf32>
    tpu.vector_store %arg19[%c56_78, %c0_79], %115 {strides = array<i32>} : memref<72x512xf32, #tpu.memory_space<vmem>>, vector<4x512xf32>,
    %c491_i32_80 = arith.constant 491 : i32
    %117 = tpu.dynamic_rotate %48 by %c491_i32_80 dim 1 : vector<4x512xf32>, i32 -> vector<4x512xf32>
    %c24_81 = arith.constant 24 : index
    %c0_82 = arith.constant 0 : index
    %118 = vector.load %arg19[%c24_81, %c0_82] : memref<72x512xf32, #tpu.memory_space<vmem>>, vector<4x512xf32>
    tpu.vector_store %arg19[%c24_81, %c0_82], %117 {strides = array<i32>} : memref<72x512xf32, #tpu.memory_space<vmem>>, vector<4x512xf32>,
    %c449_i32 = arith.constant 449 : i32
    %119 = tpu.dynamic_rotate %48 by %c449_i32 dim 1 : vector<4x512xf32>, i32 -> vector<4x512xf32>
    %c60 = arith.constant 60 : index
    %c0_83 = arith.constant 0 : index
    %120 = vector.load %arg19[%c60, %c0_83] : memref<72x512xf32, #tpu.memory_space<vmem>>, vector<4x512xf32>
    tpu.vector_store %arg19[%c60, %c0_83], %119 {strides = array<i32>} : memref<72x512xf32, #tpu.memory_space<vmem>>, vector<4x512xf32>,
    %c490_i32_84 = arith.constant 490 : i32
    %121 = tpu.dynamic_rotate %48 by %c490_i32_84 dim 1 : vector<4x512xf32>, i32 -> vector<4x512xf32>
    %c28 = arith.constant 28 : index
    %c0_85 = arith.constant 0 : index
    %122 = vector.load %arg19[%c28, %c0_85] : memref<72x512xf32, #tpu.memory_space<vmem>>, vector<4x512xf32>
    tpu.vector_store %arg19[%c28, %c0_85], %121 {strides = array<i32>} : memref<72x512xf32, #tpu.memory_space<vmem>>, vector<4x512xf32>,
    %c446_i32 = arith.constant 446 : i32
    %123 = tpu.dynamic_rotate %48 by %c446_i32 dim 1 : vector<4x512xf32>, i32 -> vector<4x512xf32>
    %c64_86 = arith.constant 64 : index
    %c0_87 = arith.constant 0 : index
    %124 = vector.load %arg19[%c64_86, %c0_87] : memref<72x512xf32, #tpu.memory_space<vmem>>, vector<4x512xf32>
    tpu.vector_store %arg19[%c64_86, %c0_87], %123 {strides = array<i32>} : memref<72x512xf32, #tpu.memory_space<vmem>>, vector<4x512xf32>,
    %c489_i32_88 = arith.constant 489 : i32
    %125 = tpu.dynamic_rotate %48 by %c489_i32_88 dim 1 : vector<4x512xf32>, i32 -> vector<4x512xf32>
    %c32_89 = arith.constant 32 : index
    %c0_90 = arith.constant 0 : index
    %126 = vector.load %arg19[%c32_89, %c0_90] : memref<72x512xf32, #tpu.memory_space<vmem>>, vector<4x512xf32>
    tpu.vector_store %arg19[%c32_89, %c0_90], %125 {strides = array<i32>} : memref<72x512xf32, #tpu.memory_space<vmem>>, vector<4x512xf32>,
    %c443_i32 = arith.constant 443 : i32
    %127 = tpu.dynamic_rotate %48 by %c443_i32 dim 1 : vector<4x512xf32>, i32 -> vector<4x512xf32>
    %c68 = arith.constant 68 : index
    %c0_91 = arith.constant 0 : index
    %128 = vector.load %arg19[%c68, %c0_91] : memref<72x512xf32, #tpu.memory_space<vmem>>, vector<4x512xf32>
    tpu.vector_store %arg19[%c68, %c0_91], %127 {strides = array<i32>} : memref<72x512xf32, #tpu.memory_space<vmem>>, vector<4x512xf32>,
    %c0_92 = arith.constant 0 : index
    %c0_93 = arith.constant 0 : index
    %129 = vector.load %arg12[%c0_92, %c0_93] : memref<8x36xf32, #tpu.memory_space<vmem>>, vector<8x36xf32>
    %c0_94 = arith.constant 0 : index
    %c0_95 = arith.constant 0 : index
    %130 = vector.load %arg19[%c0_94, %c0_95] : memref<72x512xf32, #tpu.memory_space<vmem>>, vector<36x512xf32>
    %cst_96 = arith.constant dense<0.000000e+00> : vector<8x512xf32>
    %131 = tpu.matmul %129, %130, %cst_96 {dimension_numbers = #tpu.dot_dimension_numbers<[1], [0], [0], [1], [0, 0, 1, 1], [], []>} : vector<8x36xf32>, vector<36x512xf32>, vector<8x512xf32> -> vector<8x512xf32>
    %c0_97 = arith.constant 0 : index
    %c0_98 = arith.constant 0 : index
    %132 = vector.load %arg13[%c0_97, %c0_98] : memref<8x36xf32, #tpu.memory_space<vmem>>, vector<8x36xf32>
    %c36_99 = arith.constant 36 : index
    %c0_100 = arith.constant 0 : index
    %133 = vector.load %arg19[%c36_99, %c0_100] : memref<72x512xf32, #tpu.memory_space<vmem>>, vector<36x512xf32>
    %cst_101 = arith.constant dense<0.000000e+00> : vector<8x512xf32>
    %134 = tpu.matmul %132, %133, %cst_101 {dimension_numbers = #tpu.dot_dimension_numbers<[1], [0], [0], [1], [0, 0, 1, 1], [], []>} : vector<8x36xf32>, vector<36x512xf32>, vector<8x512xf32> -> vector<8x512xf32>
    %135 = vector.broadcast %94 : vector<1x512xf32> to vector<8x512xf32>
    %136 = arith.mulf %135, %131 : vector<8x512xf32>
    %cst_102 = arith.constant 1.000000e+00 : f32
    %137 = vector.broadcast %cst_102 : f32 to vector<1x512xf32>
    %138 = arith.subf %137, %94 : vector<1x512xf32>
    %139 = vector.broadcast %138 : vector<1x512xf32> to vector<8x512xf32>
    %140 = arith.mulf %139, %134 : vector<8x512xf32>
    %141 = arith.addf %136, %140 : vector<8x512xf32>
    %142 = vector.broadcast %34 : vector<1x512xf32> to vector<8x512xf32>
    %143 = arith.mulf %141, %142 : vector<8x512xf32>
    %cst_103 = arith.constant dense<0.000000e+00> : vector<8xf32>
    %144 = vector.multi_reduction <add>, %143, %cst_103 [1] : vector<8x512xf32> to vector<8xf32>
    %145 = vector.shape_cast %144 : vector<8xf32> to vector<8x1xf32>
    %cst_104 = arith.constant 3.906250e-03 : f32
    %146 = vector.broadcast %cst_104 : f32 to vector<8x1xf32>
    %147 = arith.mulf %145, %146 : vector<8x1xf32>
    %c0_105 = arith.constant 0 : index
    %c0_106 = arith.constant 0 : index
    %148 = vector.load %arg14[%c0_105, %c0_106] : memref<8x8xf32, #tpu.memory_space<vmem>>, vector<8x8xf32>
    %cst_107 = arith.constant dense<0.000000e+00> : vector<8x1xf32>
    %149 = tpu.matmul %148, %147, %cst_107 {dimension_numbers = #tpu.dot_dimension_numbers<[1], [0], [0], [1], [0, 0, 1, 1], [], []>} : vector<8x8xf32>, vector<8x1xf32>, vector<8x1xf32> -> vector<8x1xf32>
    %c0_108 = arith.constant 0 : index
    %c0_109 = arith.constant 0 : index
    %150 = vector.load %arg15[%c0_108, %c0_109] : memref<8x1xf32, #tpu.memory_space<vmem>>, vector<8x1xf32>
    %151 = arith.addf %149, %150 : vector<8x1xf32>
    %152 = vector.broadcast %151 : vector<8x1xf32> to vector<8x512xf32>
    %153 = arith.addf %141, %152 : vector<8x512xf32>
    %c0_110 = arith.constant 0 : index
    %c0_111 = arith.constant 0 : index
    %154 = vector.load %arg16[%c0_110, %c0_111] : memref<8x1xf32, #tpu.memory_space<vmem>>, vector<8x1xf32>
    %155 = vector.broadcast %154 : vector<8x1xf32> to vector<8x512xf32>
    %156 = arith.mulf %153, %155 : vector<8x512xf32>
    %c0_112 = arith.constant 0 : index
    %c0_113 = arith.constant 0 : index
    %157 = vector.load %arg17[%c0_112, %c0_113] : memref<8x1xf32, #tpu.memory_space<vmem>>, vector<8x1xf32>
    %158 = vector.broadcast %157 : vector<8x1xf32> to vector<8x512xf32>
    %159 = arith.addf %156, %158 : vector<8x512xf32>
    %160 = arith.negf %159 : vector<8x512xf32>
    %161 = math.exp %160 : vector<8x512xf32>
    %cst_114 = arith.constant 1.000000e+00 : f32
    %162 = vector.broadcast %cst_114 : f32 to vector<8x512xf32>
    %163 = arith.addf %162, %161 : vector<8x512xf32>
    %164 = arith.divf %162, %163 : vector<8x512xf32>
    %165 = arith.mulf %159, %164 : vector<8x512xf32>
    %166 = arith.addf %165, %1 : vector<8x512xf32>
    %167 = vector.shape_cast %166 : vector<8x512xf32> to vector<1x8x512xf32>
    %c0_115 = arith.constant 0 : index
    %c0_116 = arith.constant 0 : index
    %c0_117 = arith.constant 0 : index
    %168 = vector.load %arg18[%c0_115, %c0_116, %c0_117] : memref<1x8x512xf32, #tpu.memory_space<vmem>>, vector<1x8x512xf32>
    tpu.vector_store %arg18[%c0_115, %c0_116, %c0_117], %167 {strides = array<i32>} : memref<1x8x512xf32, #tpu.memory_space<vmem>>, vector<1x8x512xf32>,
    return
  }
  func.func @transform_0(%arg0: i32) -> (i32, i32, i32) {
    %c0_i32 = arith.constant 0 : i32
    %c0_i32_0 = arith.constant 0 : i32
    %c0_i32_1 = arith.constant 0 : i32
    return %arg0, %c0_i32, %c0_i32_0 : i32, i32, i32
  }
  func.func @transform_1(%arg0: i32) -> (i32, i32) {
    %c0_i32 = arith.constant 0 : i32
    %c0_i32_0 = arith.constant 0 : i32
    %c0_i32_1 = arith.constant 0 : i32
    return %c0_i32, %c0_i32_0 : i32, i32
  }
  func.func @transform_2(%arg0: i32) -> (i32, i32) {
    %c0_i32 = arith.constant 0 : i32
    %c0_i32_0 = arith.constant 0 : i32
    %c0_i32_1 = arith.constant 0 : i32
    return %c0_i32, %c0_i32_0 : i32, i32
  }
  func.func @transform_3(%arg0: i32) -> (i32, i32) {
    %c0_i32 = arith.constant 0 : i32
    %c0_i32_0 = arith.constant 0 : i32
    %c0_i32_1 = arith.constant 0 : i32
    return %c0_i32, %c0_i32_0 : i32, i32
  }
  func.func @transform_4(%arg0: i32) -> (i32, i32) {
    %c0_i32 = arith.constant 0 : i32
    %c0_i32_0 = arith.constant 0 : i32
    %c0_i32_1 = arith.constant 0 : i32
    return %c0_i32, %c0_i32_0 : i32, i32
  }
  func.func @transform_5(%arg0: i32) -> (i32, i32) {
    %c0_i32 = arith.constant 0 : i32
    %c0_i32_0 = arith.constant 0 : i32
    %c0_i32_1 = arith.constant 0 : i32
    return %c0_i32, %c0_i32_0 : i32, i32
  }
  func.func @transform_6(%arg0: i32) -> (i32, i32) {
    %c0_i32 = arith.constant 0 : i32
    %c0_i32_0 = arith.constant 0 : i32
    %c0_i32_1 = arith.constant 0 : i32
    return %c0_i32, %c0_i32_0 : i32, i32
  }
  func.func @transform_7(%arg0: i32) -> (i32, i32) {
    %c0_i32 = arith.constant 0 : i32
    %c0_i32_0 = arith.constant 0 : i32
    %c0_i32_1 = arith.constant 0 : i32
    return %c0_i32, %c0_i32_0 : i32, i32
  }
  func.func @transform_8(%arg0: i32) -> (i32, i32) {
    %c0_i32 = arith.constant 0 : i32
    %c0_i32_0 = arith.constant 0 : i32
    %c0_i32_1 = arith.constant 0 : i32
    return %c0_i32, %c0_i32_0 : i32, i32
  }
  func.func @transform_9(%arg0: i32) -> (i32, i32) {
    %c0_i32 = arith.constant 0 : i32
    %c0_i32_0 = arith.constant 0 : i32
    %c0_i32_1 = arith.constant 0 : i32
    return %c0_i32, %c0_i32_0 : i32, i32
  }
  func.func @transform_10(%arg0: i32) -> (i32, i32) {
    %c0_i32 = arith.constant 0 : i32
    %c0_i32_0 = arith.constant 0 : i32
    %c0_i32_1 = arith.constant 0 : i32
    return %c0_i32, %c0_i32_0 : i32, i32
  }
  func.func @transform_11(%arg0: i32) -> (i32, i32) {
    %c0_i32 = arith.constant 0 : i32
    %c0_i32_0 = arith.constant 0 : i32
    %c0_i32_1 = arith.constant 0 : i32
    return %c0_i32, %c0_i32_0 : i32, i32
  }
  func.func @transform_12(%arg0: i32) -> (i32, i32) {
    %c0_i32 = arith.constant 0 : i32
    %c0_i32_0 = arith.constant 0 : i32
    %c0_i32_1 = arith.constant 0 : i32
    return %c0_i32, %c0_i32_0 : i32, i32
  }
  func.func @transform_13(%arg0: i32) -> (i32, i32) {
    %c0_i32 = arith.constant 0 : i32
    %c0_i32_0 = arith.constant 0 : i32
    %c0_i32_1 = arith.constant 0 : i32
    return %c0_i32, %c0_i32_0 : i32, i32
  }
  func.func @transform_14(%arg0: i32) -> (i32, i32) {
    %c0_i32 = arith.constant 0 : i32
    %c0_i32_0 = arith.constant 0 : i32
    %c0_i32_1 = arith.constant 0 : i32
    return %c0_i32, %c0_i32_0 : i32, i32
  }
  func.func @transform_15(%arg0: i32) -> (i32, i32) {
    %c0_i32 = arith.constant 0 : i32
    %c0_i32_0 = arith.constant 0 : i32
    %c0_i32_1 = arith.constant 0 : i32
    return %c0_i32, %c0_i32_0 : i32, i32
  }
  func.func @transform_16(%arg0: i32) -> (i32, i32) {
    %c0_i32 = arith.constant 0 : i32
    %c0_i32_0 = arith.constant 0 : i32
    %c0_i32_1 = arith.constant 0 : i32
    return %c0_i32, %c0_i32_0 : i32, i32
  }
  func.func @transform_17(%arg0: i32) -> (i32, i32, i32) {
    %c0_i32 = arith.constant 0 : i32
    %c0_i32_0 = arith.constant 0 : i32
    %c0_i32_1 = arith.constant 0 : i32
    return %arg0, %c0_i32, %c0_i32_0 : i32, i32, i32
  }
}

</mosaic_0001>

<llo_original>
// kernel: bottleneck_saconv.1
$region0: #{bottleneck_saconv.1}
  #allocation0 [shape = 'u32[]', space=smem, size = 0x4, offset = 0x4, fixed_abs, tag = 'smem constant byte address 0x4 - core index']
  #allocation1 [shape = 'u32[144,128]{1,0:T(1,128)}', space=vmem, size = 0x12000, scoped, tag = 'internal scratch']
  #allocation2 [shape = 'f32[72,512]{1,0:T(8,128)}', space=vmem, size = 0x24000, scoped, tag = 'scratch operand']
  #allocation3 [shape = 'f32[1,1]{1,0:T(1,128)S(1)}', space=vmem, size = 0x200, scoped, tag = 'scoped memory for bottleneck_saconv.1']
  %s0 = inlined_call_operand.vmem [shape: f32[2,8,512], index: 0, kind: input, shape index: {}]
  %s1 = inlined_call_operand.vmem [shape: f32[1,512], index: 1, kind: input, shape index: {}]
  %s2 = inlined_call_operand.vmem [shape: f32[5,512], index: 2, kind: input, shape index: {}]
  %s3 = inlined_call_operand.vmem [shape: f32[5,512], index: 3, kind: input, shape index: {}]
  %s4 = inlined_call_operand.vmem [shape: f32[4,72], index: 4, kind: input, shape index: {}]
  %s5 = inlined_call_operand.vmem [shape: f32[4,1], index: 5, kind: input, shape index: {}]
  %s6 = inlined_call_operand.vmem [shape: f32[4,1], index: 6, kind: input, shape index: {}]
  %s7 = inlined_call_operand.vmem [shape: f32[4,4], index: 7, kind: input, shape index: {}]
  %s8 = inlined_call_operand.vmem [shape: f32[4,1], index: 8, kind: input, shape index: {}]
  %s9 = inlined_call_operand.vmem [shape: f32[4,1], index: 9, kind: input, shape index: {}]
  %s10 = inlined_call_operand.<no memory space> [shape: f32[1,1], index: 10, kind: input, shape index: {}]
  %s11 = inlined_call_operand.vmem [shape: f32[8,36], index: 11, kind: input, shape index: {}]
  %s12 = inlined_call_operand.vmem [shape: f32[8,36], index: 12, kind: input, shape index: {}]
  %s13 = inlined_call_operand.vmem [shape: f32[8,8], index: 13, kind: input, shape index: {}]
  %s14 = inlined_call_operand.vmem [shape: f32[8,1], index: 14, kind: input, shape index: {}]
  %s15 = inlined_call_operand.vmem [shape: f32[8,1], index: 15, kind: input, shape index: {}]
  %s16 = inlined_call_operand.vmem [shape: f32[8,1], index: 16, kind: input, shape index: {}]
  %s17 = inlined_call_operand.vmem [shape: f32[2,8,512], index: 17, kind: output, shape index: {}]
  %s18 = sld [smem:[#allocation0]]
  $region101: #{bottleneck_saconv.1} parent=0
    _
  %s20 = ssub.s32 1, %s18
  %s21 = scalar_select 0, %s20, %s18
  %v22 = vstv %s10
  %23 = vst [vmem:[#allocation3] sm:$0x1] %v22
  loop: start=0, step=1, limit=4
  $region2: #{bottleneck_saconv.1} parent=0 // loop_pre_header
    _
  $region3: #{bottleneck_saconv.1} parent=0 // loop_header
    %s25 = sphi 0, %s29
    %p26 = scmp.ge.s32.totalorder %s25, 4
    %s35 = sphi 0, %s37
    %s38 = sphi 0, %s35
    %s39 = sphi 0, %s38
    %s55 = sphi 0, %s39
    %s59 = sphi 0, %s59
    %s61 = sphi 0, %s59
    %s62 = sphi 0, %s61
    %s76 = sphi 0, %s62
    %s80 = sphi 0, %s80
    %s82 = sphi 0, %s80
    %s83 = sphi 0, %s82
    %s97 = sphi 0, %s83
    %s101 = sphi 0, %s101
    %s103 = sphi 0, %s101
    %s104 = sphi 0, %s103
    %s118 = sphi 0, %s104
    %s122 = sphi 0, %s122
    %s124 = sphi 0, %s122
    %s125 = sphi 0, %s124
    %s139 = sphi 0, %s125
    %s143 = sphi 0, %s143
    %s145 = sphi 0, %s143
    %s146 = sphi 0, %s145
    %s160 = sphi 0, %s146
    %s164 = sphi 0, %s164
    %s166 = sphi 0, %s164
    %s167 = sphi 0, %s166
    %s181 = sphi 0, %s167
    %s185 = sphi 0, %s185
    %s187 = sphi 0, %s185
    %s188 = sphi 0, %s187
    %s202 = sphi 0, %s188
    %s206 = sphi 0, %s206
    %s208 = sphi 0, %s206
    %s209 = sphi 0, %s208
    %s223 = sphi 0, %s209
    %s227 = sphi 0, %s227
    %s229 = sphi 0, %s227
    %s230 = sphi 0, %s229
    %s244 = sphi 0, %s230
    %s248 = sphi 0, %s248
    %s250 = sphi 0, %s248
    %s251 = sphi 0, %s250
    %s265 = sphi 0, %s251
    %s269 = sphi 0, %s269
    %s271 = sphi 0, %s269
    %s272 = sphi 0, %s271
    %s286 = sphi 0, %s272
    %s290 = sphi 0, %s290
    %s292 = sphi 0, %s290
    %s293 = sphi 0, %s292
    %s307 = sphi 0, %s293
    %s311 = sphi 0, %s311
    %s313 = sphi 0, %s311
    %s314 = sphi 0, %s313
    %s328 = sphi 0, %s314
    %s332 = sphi 0, %s332
    %s334 = sphi 0, %s332
    %s335 = sphi 0, %s334
    %s349 = sphi 0, %s335
    %s353 = sphi 0, %s353
    %s355 = sphi 0, %s353
    %s356 = sphi 0, %s355
    %s370 = sphi 0, %s356
    %s374 = sphi 0, %s374
    %s376 = sphi 0, %s374
    %s377 = sphi 0, %s376
    %s391 = sphi 0, %s377
    %s397 = sphi 0, %s399
    %s400 = sphi 0, %s397
    %s401 = sphi 0, %s400
    %s417 = sphi 0, %s401
  $region4: #{bottleneck_saconv.1} parent=0 // loop_header_branch
    %28 = sbr.rel (%p26) target = $region8
  $region5: #{bottleneck_saconv.1} parent=0 // loop_body
    %s30 = ssub.s32 %s25, 1
    %s31 = ssub.s32 %s25, 2
    %s32 = sadd.s32 %s25, 1
    %s33 = ssub.s32 %s25, %s32
    %p34 = scmp.eq.s32.totalorder %s33, 0
    %s36 = sadd.s32 %s35, 1
    %s37 = scalar_select %p34, %s35, %s36
    %p40 = pneg %p34
    %p41 = scmp.eq.s32.totalorder %s25, 1
    %p42 = por %p40, %p41
    %p43 = scmp.ne.s32.totalorder %s35, %s38
    %p44 = scmp.eq.s32.totalorder %s25, 0
    %p45 = por %p43, %p44
    %p46 = scmp.ne.s32.totalorder %s35, %s38
    %p47 = scmp.eq.s32.totalorder %s30, 1
    %p48 = por %p46, %p47
    %p49 = scmp.ne.s32.totalorder %s38, %s39
    %p50 = scmp.eq.s32.totalorder %s30, 0
    %p51 = por %p49, %p50
    %p52 = scmp.ne.s32.totalorder %s38, %s39
    %p53 = scmp.eq.s32.totalorder %s31, 1
    %p54 = por %p52, %p53
    %p56 = scmp.ne.s32.totalorder %s39, %s55
    %p57 = scmp.eq.s32.totalorder %s31, 0
    %p58 = por %p56, %p57
    %s60 = sadd.s32 %s59, 1
    %p63 = scmp.eq.s32.totalorder %s25, 1
    %p64 = scmp.ne.s32.totalorder %s59, %s61
    %p65 = scmp.eq.s32.totalorder %s25, 0
    %p66 = por %p64, %p65
    %p67 = scmp.ne.s32.totalorder %s59, %s61
    %p68 = scmp.eq.s32.totalorder %s30, 1
    %p69 = por %p67, %p68
    %p70 = scmp.ne.s32.totalorder %s61, %s62
    %p71 = scmp.eq.s32.totalorder %s30, 0
    %p72 = por %p70, %p71
    %p73 = scmp.ne.s32.totalorder %s61, %s62
    %p74 = scmp.eq.s32.totalorder %s31, 1
    %p75 = por %p73, %p74
    %p77 = scmp.ne.s32.totalorder %s62, %s76
    %p78 = scmp.eq.s32.totalorder %s31, 0
    %p79 = por %p77, %p78
    %s81 = sadd.s32 %s80, 1
    %p84 = scmp.eq.s32.totalorder %s25, 1
    %p85 = scmp.ne.s32.totalorder %s80, %s82
    %p86 = scmp.eq.s32.totalorder %s25, 0
    %p87 = por %p85, %p86
    %p88 = scmp.ne.s32.totalorder %s80, %s82
    %p89 = scmp.eq.s32.totalorder %s30, 1
    %p90 = por %p88, %p89
    %p91 = scmp.ne.s32.totalorder %s82, %s83
    %p92 = scmp.eq.s32.totalorder %s30, 0
    %p93 = por %p91, %p92
    %p94 = scmp.ne.s32.totalorder %s82, %s83
    %p95 = scmp.eq.s32.totalorder %s31, 1
    %p96 = por %p94, %p95
    %p98 = scmp.ne.s32.totalorder %s83, %s97
    %p99 = scmp.eq.s32.totalorder %s31, 0
    %p100 = por %p98, %p99
    %s102 = sadd.s32 %s101, 1
    %p105 = scmp.eq.s32.totalorder %s25, 1
    %p106 = scmp.ne.s32.totalorder %s101, %s103
    %p107 = scmp.eq.s32.totalorder %s25, 0
    %p108 = por %p106, %p107
    %p109 = scmp.ne.s32.totalorder %s101, %s103
    %p110 = scmp.eq.s32.totalorder %s30, 1
    %p111 = por %p109, %p110
    %p112 = scmp.ne.s32.totalorder %s103, %s104
    %p113 = scmp.eq.s32.totalorder %s30, 0
    %p114 = por %p112, %p113
    %p115 = scmp.ne.s32.totalorder %s103, %s104
    %p116 = scmp.eq.s32.totalorder %s31, 1
    %p117 = por %p115, %p116
    %p119 = scmp.ne.s32.totalorder %s104, %s118
    %p120 = scmp.eq.s32.totalorder %s31, 0
    %p121 = por %p119, %p120
    %s123 = sadd.s32 %s122, 1
    %p126 = scmp.eq.s32.totalorder %s25, 1
    %p127 = scmp.ne.s32.totalorder %s122, %s124
    %p128 = scmp.eq.s32.totalorder %s25, 0
    %p129 = por %p127, %p128
    %p130 = scmp.ne.s32.totalorder %s122, %s124
    %p131 = scmp.eq.s32.totalorder %s30, 1
    %p132 = por %p130, %p131
    %p133 = scmp.ne.s32.totalorder %s124, %s125
    %p134 = scmp.eq.s32.totalorder %s30, 0
    %p135 = por %p133, %p134
    %p136 = scmp.ne.s32.totalorder %s124, %s125
    %p137 = scmp.eq.s32.totalorder %s31, 1
    %p138 = por %p136, %p137
    %p140 = scmp.ne.s32.totalorder %s125, %s139
    %p141 = scmp.eq.s32.totalorder %s31, 0
    %p142 = por %p140, %p141
    %s144 = sadd.s32 %s143, 1
    %p147 = scmp.eq.s32.totalorder %s25, 1
    %p148 = scmp.ne.s32.totalorder %s143, %s145
    %p149 = scmp.eq.s32.totalorder %s25, 0
    %p150 = por %p148, %p149
    %p151 = scmp.ne.s32.totalorder %s143, %s145
    %p152 = scmp.eq.s32.totalorder %s30, 1
    %p153 = por %p151, %p152
    %p154 = scmp.ne.s32.totalorder %s145, %s146
    %p155 = scmp.eq.s32.totalorder %s30, 0
    %p156 = por %p154, %p155
    %p157 = scmp.ne.s32.totalorder %s145, %s146
    %p158 = scmp.eq.s32.totalorder %s31, 1
    %p159 = por %p157, %p158
    %p161 = scmp.ne.s32.totalorder %s146, %s160
    %p162 = scmp.eq.s32.totalorder %s31, 0
    %p163 = por %p161, %p162
    %s165 = sadd.s32 %s164, 1
    %p168 = scmp.eq.s32.totalorder %s25, 1
    %p169 = scmp.ne.s32.totalorder %s164, %s166
    %p170 = scmp.eq.s32.totalorder %s25, 0
    %p171 = por %p169, %p170
    %p172 = scmp.ne.s32.totalorder %s164, %s166
    %p173 = scmp.eq.s32.totalorder %s30, 1
    %p174 = por %p172, %p173
    %p175 = scmp.ne.s32.totalorder %s166, %s167
    %p176 = scmp.eq.s32.totalorder %s30, 0
    %p177 = por %p175, %p176
    %p178 = scmp.ne.s32.totalorder %s166, %s167
    %p179 = scmp.eq.s32.totalorder %s31, 1
    %p180 = por %p178, %p179
    %p182 = scmp.ne.s32.totalorder %s167, %s181
    %p183 = scmp.eq.s32.totalorder %s31, 0
    %p184 = por %p182, %p183
    %s186 = sadd.s32 %s185, 1
    %p189 = scmp.eq.s32.totalorder %s25, 1
    %p190 = scmp.ne.s32.totalorder %s185, %s187
    %p191 = scmp.eq.s32.totalorder %s25, 0
    %p192 = por %p190, %p191
    %p193 = scmp.ne.s32.totalorder %s185, %s187
    %p194 = scmp.eq.s32.totalorder %s30, 1
    %p195 = por %p193, %p194
    %p196 = scmp.ne.s32.totalorder %s187, %s188
    %p197 = scmp.eq.s32.totalorder %s30, 0
    %p198 = por %p196, %p197
    %p199 = scmp.ne.s32.totalorder %s187, %s188
    %p200 = scmp.eq.s32.totalorder %s31, 1
    %p201 = por %p199, %p200
    %p203 = scmp.ne.s32.totalorder %s188, %s202
    %p204 = scmp.eq.s32.totalorder %s31, 0
    %p205 = por %p203, %p204
    %s207 = sadd.s32 %s206, 1
    %p210 = scmp.eq.s32.totalorder %s25, 1
    %p211 = scmp.ne.s32.totalorder %s206, %s208
    %p212 = scmp.eq.s32.totalorder %s25, 0
    %p213 = por %p211, %p212
    %p214 = scmp.ne.s32.totalorder %s206, %s208
    %p215 = scmp.eq.s32.totalorder %s30, 1
    %p216 = por %p214, %p215
    %p217 = scmp.ne.s32.totalorder %s208, %s209
    %p218 = scmp.eq.s32.totalorder %s30, 0
    %p219 = por %p217, %p218
    %p220 = scmp.ne.s32.totalorder %s208, %s209
    %p221 = scmp.eq.s32.totalorder %s31, 1
    %p222 = por %p220, %p221
    %p224 = scmp.ne.s32.totalorder %s209, %s223
    %p225 = scmp.eq.s32.totalorder %s31, 0
    %p226 = por %p224, %p225
    %s228 = sadd.s32 %s227, 1
    %p231 = scmp.eq.s32.totalorder %s25, 1
    %p232 = scmp.ne.s32.totalorder %s227, %s229
    %p233 = scmp.eq.s32.totalorder %s25, 0
    %p234 = por %p232, %p233
    %p235 = scmp.ne.s32.totalorder %s227, %s229
    %p236 = scmp.eq.s32.totalorder %s30, 1
    %p237 = por %p235, %p236
    %p238 = scmp.ne.s32.totalorder %s229, %s230
    %p239 = scmp.eq.s32.totalorder %s30, 0
    %p240 = por %p238, %p239
    %p241 = scmp.ne.s32.totalorder %s229, %s230
    %p242 = scmp.eq.s32.totalorder %s31, 1
    %p243 = por %p241, %p242
    %p245 = scmp.ne.s32.totalorder %s230, %s244
    %p246 = scmp.eq.s32.totalorder %s31, 0
    %p247 = por %p245, %p246
    %s249 = sadd.s32 %s248, 1
    %p252 = scmp.eq.s32.totalorder %s25, 1
    %p253 = scmp.ne.s32.totalorder %s248, %s250
    %p254 = scmp.eq.s32.totalorder %s25, 0
    %p255 = por %p253, %p254
    %p256 = scmp.ne.s32.totalorder %s248, %s250
    %p257 = scmp.eq.s32.totalorder %s30, 1
    %p258 = por %p256, %p257
    %p259 = scmp.ne.s32.totalorder %s250, %s251
    %p260 = scmp.eq.s32.totalorder %s30, 0
    %p261 = por %p259, %p260
    %p262 = scmp.ne.s32.totalorder %s250, %s251
    %p263 = scmp.eq.s32.totalorder %s31, 1
    %p264 = por %p262, %p263
    %p266 = scmp.ne.s32.totalorder %s251, %s265
    %p267 = scmp.eq.s32.totalorder %s31, 0
    %p268 = por %p266, %p267
    %s270 = sadd.s32 %s269, 1
    %p273 = scmp.eq.s32.totalorder %s25, 1
    %p274 = scmp.ne.s32.totalorder %s269, %s271
    %p275 = scmp.eq.s32.totalorder %s25, 0
    %p276 = por %p274, %p275
    %p277 = scmp.ne.s32.totalorder %s269, %s271
    %p278 = scmp.eq.s32.totalorder %s30, 1
    %p279 = por %p277, %p278
    %p280 = scmp.ne.s32.totalorder %s271, %s272
    %p281 = scmp.eq.s32.totalorder %s30, 0
    %p282 = por %p280, %p281
    %p283 = scmp.ne.s32.totalorder %s271, %s272
    %p284 = scmp.eq.s32.totalorder %s31, 1
    %p285 = por %p283, %p284
    %p287 = scmp.ne.s32.totalorder %s272, %s286
    %p288 = scmp.eq.s32.totalorder %s31, 0
    %p289 = por %p287, %p288
    %s291 = sadd.s32 %s290, 1
    %p294 = scmp.eq.s32.totalorder %s25, 1
    %p295 = scmp.ne.s32.totalorder %s290, %s292
    %p296 = scmp.eq.s32.totalorder %s25, 0
    %p297 = por %p295, %p296
    %p298 = scmp.ne.s32.totalorder %s290, %s292
    %p299 = scmp.eq.s32.totalorder %s30, 1
    %p300 = por %p298, %p299
    %p301 = scmp.ne.s32.totalorder %s292, %s293
    %p302 = scmp.eq.s32.totalorder %s30, 0
    %p303 = por %p301, %p302
    %p304 = scmp.ne.s32.totalorder %s292, %s293
    %p305 = scmp.eq.s32.totalorder %s31, 1
    %p306 = por %p304, %p305
    %p308 = scmp.ne.s32.totalorder %s293, %s307
    %p309 = scmp.eq.s32.totalorder %s31, 0
    %p310 = por %p308, %p309
    %s312 = sadd.s32 %s311, 1
    %p315 = scmp.eq.s32.totalorder %s25, 1
    %p316 = scmp.ne.s32.totalorder %s311, %s313
    %p317 = scmp.eq.s32.totalorder %s25, 0
    %p318 = por %p316, %p317
    %p319 = scmp.ne.s32.totalorder %s311, %s313
    %p320 = scmp.eq.s32.totalorder %s30, 1
    %p321 = por %p319, %p320
    %p322 = scmp.ne.s32.totalorder %s313, %s314
    %p323 = scmp.eq.s32.totalorder %s30, 0
    %p324 = por %p322, %p323
    %p325 = scmp.ne.s32.totalorder %s313, %s314
    %p326 = scmp.eq.s32.totalorder %s31, 1
    %p327 = por %p325, %p326
    %p329 = scmp.ne.s32.totalorder %s314, %s328
    %p330 = scmp.eq.s32.totalorder %s31, 0
    %p331 = por %p329, %p330
    %s333 = sadd.s32 %s332, 1
    %p336 = scmp.eq.s32.totalorder %s25, 1
    %p337 = scmp.ne.s32.totalorder %s332, %s334
    %p338 = scmp.eq.s32.totalorder %s25, 0
    %p339 = por %p337, %p338
    %p340 = scmp.ne.s32.totalorder %s332, %s334
    %p341 = scmp.eq.s32.totalorder %s30, 1
    %p342 = por %p340, %p341
    %p343 = scmp.ne.s32.totalorder %s334, %s335
    %p344 = scmp.eq.s32.totalorder %s30, 0
    %p345 = por %p343, %p344
    %p346 = scmp.ne.s32.totalorder %s334, %s335
    %p347 = scmp.eq.s32.totalorder %s31, 1
    %p348 = por %p346, %p347
    %p350 = scmp.ne.s32.totalorder %s335, %s349
    %p351 = scmp.eq.s32.totalorder %s31, 0
    %p352 = por %p350, %p351
    %s354 = sadd.s32 %s353, 1
    %p357 = scmp.eq.s32.totalorder %s25, 1
    %p358 = scmp.ne.s32.totalorder %s353, %s355
    %p359 = scmp.eq.s32.totalorder %s25, 0
    %p360 = por %p358, %p359
    %p361 = scmp.ne.s32.totalorder %s353, %s355
    %p362 = scmp.eq.s32.totalorder %s30, 1
    %p363 = por %p361, %p362
    %p364 = scmp.ne.s32.totalorder %s355, %s356
    %p365 = scmp.eq.s32.totalorder %s30, 0
    %p366 = por %p364, %p365
    %p367 = scmp.ne.s32.totalorder %s355, %s356
    %p368 = scmp.eq.s32.totalorder %s31, 1
    %p369 = por %p367, %p368
    %p371 = scmp.ne.s32.totalorder %s356, %s370
    %p372 = scmp.eq.s32.totalorder %s31, 0
    %p373 = por %p371, %p372
    %s375 = sadd.s32 %s374, 1
    %p378 = scmp.eq.s32.totalorder %s25, 1
    %p379 = scmp.ne.s32.totalorder %s374, %s376
    %p380 = scmp.eq.s32.totalorder %s25, 0
    %p381 = por %p379, %p380
    %p382 = scmp.ne.s32.totalorder %s374, %s376
    %p383 = scmp.eq.s32.totalorder %s30, 1
    %p384 = por %p382, %p383
    %p385 = scmp.ne.s32.totalorder %s376, %s377
    %p386 = scmp.eq.s32.totalorder %s30, 0
    %p387 = por %p385, %p386
    %p388 = scmp.ne.s32.totalorder %s376, %s377
    %p389 = scmp.eq.s32.totalorder %s31, 1
    %p390 = por %p388, %p389
    %p392 = scmp.ne.s32.totalorder %s377, %s391
    %p393 = scmp.eq.s32.totalorder %s31, 0
    %p394 = por %p392, %p393
    %s395 = ssub.s32 %s25, %s32
    %p396 = scmp.eq.s32.totalorder %s395, 0
    %s398 = sadd.s32 %s397, 1
    %s399 = scalar_select %p396, %s397, %s398
    %p402 = pneg %p396
    %p403 = scmp.eq.s32.totalorder %s25, 1
    %p404 = por %p402, %p403
    %p405 = scmp.ne.s32.totalorder %s397, %s400
    %p406 = scmp.eq.s32.totalorder %s25, 0
    %p407 = por %p405, %p406
    %p408 = scmp.ne.s32.totalorder %s397, %s400
    %p409 = scmp.eq.s32.totalorder %s30, 1
    %p410 = por %p408, %p409
    %p411 = scmp.ne.s32.totalorder %s400, %s401
    %p412 = scmp.eq.s32.totalorder %s30, 0
    %p413 = por %p411, %p412
    %p414 = scmp.ne.s32.totalorder %s400, %s401
    %p415 = scmp.eq.s32.totalorder %s31, 1
    %p416 = por %p414, %p415
    %p418 = scmp.ne.s32.totalorder %s401, %s417
    %p419 = scmp.eq.s32.totalorder %s31, 0
    %p420 = por %p418, %p419
    %p421 = scmp.le.s32.totalorder 1, %s25
    %p422 = scmp.lt.s32.totalorder %s25, 3
    %p423 = pnand %p421, %p422
    %p424 = pneg %p423
    // Predicated region
    $region9: #{bottleneck_saconv.1} parent=5 // pred_check
      _
    $region10: #{bottleneck_saconv.1} parent=5 // pred_check_branch
      %426 = sbr.rel (%p423) target = $region12
    $region11: #{bottleneck_saconv.1} parent=5 // pred_region
      %s427 = ssub.s32 %s25, 1
      // Predicated region
      $region13: #{bottleneck_saconv.1} parent=11 // pred_check
        %p428 = pneg %p72
      $region14: #{bottleneck_saconv.1} parent=11 // pred_check_branch
        %430 = sbr.rel (%p428) target = $region16
      $region15: #{bottleneck_saconv.1} parent=11 // pred_region
        _
      $region16: #{bottleneck_saconv.1} parent=11 // pred_fallthru
        _
      // Predicated region
      $region17: #{bottleneck_saconv.1} parent=11 // pred_check
        %p431 = pneg %p93
      $region18: #{bottleneck_saconv.1} parent=11 // pred_check_branch
        %433 = sbr.rel (%p431) target = $region20
      $region19: #{bottleneck_saconv.1} parent=11 // pred_region
        _
      $region20: #{bottleneck_saconv.1} parent=11 // pred_fallthru
        _
      // Predicated region
      $region21: #{bottleneck_saconv.1} parent=11 // pred_check
        %p434 = pneg %p114
      $region22: #{bottleneck_saconv.1} parent=11 // pred_check_branch
        %436 = sbr.rel (%p434) target = $region24
      $region23: #{bottleneck_saconv.1} parent=11 // pred_region
        _
      $region24: #{bottleneck_saconv.1} parent=11 // pred_fallthru
        _
      // Predicated region
      $region25: #{bottleneck_saconv.1} parent=11 // pred_check
        %p437 = pneg %p135
      $region26: #{bottleneck_saconv.1} parent=11 // pred_check_branch
        %439 = sbr.rel (%p437) target = $region28
      $region27: #{bottleneck_saconv.1} parent=11 // pred_region
        _
      $region28: #{bottleneck_saconv.1} parent=11 // pred_fallthru
        _
      // Predicated region
      $region29: #{bottleneck_saconv.1} parent=11 // pred_check
        %p440 = pneg %p156
      $region30: #{bottleneck_saconv.1} parent=11 // pred_check_branch
        %442 = sbr.rel (%p440) target = $region32
      $region31: #{bottleneck_saconv.1} parent=11 // pred_region
        _
      $region32: #{bottleneck_saconv.1} parent=11 // pred_fallthru
        _
      // Predicated region
      $region33: #{bottleneck_saconv.1} parent=11 // pred_check
        %p443 = pneg %p177
      $region34: #{bottleneck_saconv.1} parent=11 // pred_check_branch
        %445 = sbr.rel (%p443) target = $region36
      $region35: #{bottleneck_saconv.1} parent=11 // pred_region
        _
      $region36: #{bottleneck_saconv.1} parent=11 // pred_fallthru
        _
      // Predicated region
      $region37: #{bottleneck_saconv.1} parent=11 // pred_check
        %p446 = pneg %p198
      $region38: #{bottleneck_saconv.1} parent=11 // pred_check_branch
        %448 = sbr.rel (%p446) target = $region40
      $region39: #{bottleneck_saconv.1} parent=11 // pred_region
        _
      $region40: #{bottleneck_saconv.1} parent=11 // pred_fallthru
        _
      // Predicated region
      $region41: #{bottleneck_saconv.1} parent=11 // pred_check
        %p449 = pneg %p219
      $region42: #{bottleneck_saconv.1} parent=11 // pred_check_branch
        %451 = sbr.rel (%p449) target = $region44
      $region43: #{bottleneck_saconv.1} parent=11 // pred_region
        _
      $region44: #{bottleneck_saconv.1} parent=11 // pred_fallthru
        _
      // Predicated region
      $region45: #{bottleneck_saconv.1} parent=11 // pred_check
        %p452 = pneg %p240
      $region46: #{bottleneck_saconv.1} parent=11 // pred_check_branch
        %454 = sbr.rel (%p452) target = $region48
      $region47: #{bottleneck_saconv.1} parent=11 // pred_region
        _
      $region48: #{bottleneck_saconv.1} parent=11 // pred_fallthru
        _
      // Predicated region
      $region49: #{bottleneck_saconv.1} parent=11 // pred_check
        %p455 = pneg %p261
      $region50: #{bottleneck_saconv.1} parent=11 // pred_check_branch
        %457 = sbr.rel (%p455) target = $region52
      $region51: #{bottleneck_saconv.1} parent=11 // pred_region
        _
      $region52: #{bottleneck_saconv.1} parent=11 // pred_fallthru
        _
      // Predicated region
      $region53: #{bottleneck_saconv.1} parent=11 // pred_check
        %p458 = pneg %p282
      $region54: #{bottleneck_saconv.1} parent=11 // pred_check_branch
        %460 = sbr.rel (%p458) target = $region56
      $region55: #{bottleneck_saconv.1} parent=11 // pred_region
        _
      $region56: #{bottleneck_saconv.1} parent=11 // pred_fallthru
        _
      // Predicated region
      $region57: #{bottleneck_saconv.1} parent=11 // pred_check
        %p461 = pneg %p303
      $region58: #{bottleneck_saconv.1} parent=11 // pred_check_branch
        %463 = sbr.rel (%p461) target = $region60
      $region59: #{bottleneck_saconv.1} parent=11 // pred_region
        _
      $region60: #{bottleneck_saconv.1} parent=11 // pred_fallthru
        _
      // Predicated region
      $region61: #{bottleneck_saconv.1} parent=11 // pred_check
        %p464 = pneg %p324
      $region62: #{bottleneck_saconv.1} parent=11 // pred_check_branch
        %466 = sbr.rel (%p464) target = $region64
      $region63: #{bottleneck_saconv.1} parent=11 // pred_region
        _
      $region64: #{bottleneck_saconv.1} parent=11 // pred_fallthru
        _
      // Predicated region
      $region65: #{bottleneck_saconv.1} parent=11 // pred_check
        %p467 = pneg %p345
      $region66: #{bottleneck_saconv.1} parent=11 // pred_check_branch
        %469 = sbr.rel (%p467) target = $region68
      $region67: #{bottleneck_saconv.1} parent=11 // pred_region
        _
      $region68: #{bottleneck_saconv.1} parent=11 // pred_fallthru
        _
      // Predicated region
      $region69: #{bottleneck_saconv.1} parent=11 // pred_check
        %p470 = pneg %p366
      $region70: #{bottleneck_saconv.1} parent=11 // pred_check_branch
        %472 = sbr.rel (%p470) target = $region72
      $region71: #{bottleneck_saconv.1} parent=11 // pred_region
        _
      $region72: #{bottleneck_saconv.1} parent=11 // pred_fallthru
        _
      // Predicated region
      $region73: #{bottleneck_saconv.1} parent=11 // pred_check
        %p473 = pneg %p387
      $region74: #{bottleneck_saconv.1} parent=11 // pred_check_branch
        %475 = sbr.rel (%p473) target = $region76
      $region75: #{bottleneck_saconv.1} parent=11 // pred_region
        _
      $region76: #{bottleneck_saconv.1} parent=11 // pred_fallthru
        _
    $region12: #{bottleneck_saconv.1} parent=5 // pred_fallthru
      _
    %p476 = scmp.lt.s32.totalorder %s25, 2
    // Predicated region
    $region77: #{bottleneck_saconv.1} parent=5 // pred_check
      %p477 = pneg %p476
    $region78: #{bottleneck_saconv.1} parent=5 // pred_check_branch
      %479 = sbr.rel (%p477) target = $region80
    $region79: #{bottleneck_saconv.1} parent=5 // pred_region
      // Predicated region
      $region81: #{bottleneck_saconv.1} parent=79 // pred_check
        %p480 = pneg %p45
      $region82: #{bottleneck_saconv.1} parent=79 // pred_check_branch
        %482 = sbr.rel (%p480) target = $region84
      $region83: #{bottleneck_saconv.1} parent=79 // pred_region
        %p483 = scmp.lt.s32.totalorder %s25, 1
        %s484 = scalar_select %p483, %s25, 1
        %s485 = smul.addr %s484, 4
        %s486 = smul.addr %s485, 8
        %s487 = scalar_lea.vmem %s0, %s486
      $region84: #{bottleneck_saconv.1} parent=79 // pred_fallthru
        _
    $region80: #{bottleneck_saconv.1} parent=5 // pred_fallthru
      _
    %p488 = scmp.le.s32.totalorder 1, %s25
    %p489 = scmp.lt.s32.totalorder %s25, 3
    %p490 = pnand %p488, %p489
    %p491 = pneg %p490
    // Predicated region
    $region85: #{bottleneck_saconv.1} parent=5 // pred_check
      _
    $region86: #{bottleneck_saconv.1} parent=5 // pred_check_branch
      %493 = sbr.rel (%p490) target = $region88
    $region87: #{bottleneck_saconv.1} parent=5 // pred_region
      %s494 = ssub.s32 %s25, 1
      %p495 = scmp.lt.s32.totalorder %s30, 1
      %s496 = scalar_select %p495, %s30, 1
      %s497 = smul.addr %s496, 4
      %s498 = smul.addr %s497, 8
      %s499 = scalar_lea.vmem %s0, %s498
      %p500 = pneg %p51
      %p501 = pneg %p48
      %p502 = pneg %p72
      %p503 = pneg %p69
      %p504 = pneg %p93
      %p505 = pneg %p90
      %p506 = pneg %p114
      %p507 = pneg %p111
      %p508 = pneg %p135
      %p509 = pneg %p132
      %p510 = pneg %p156
      %p511 = pneg %p153
      %p512 = pneg %p177
      %p513 = pneg %p174
      %p514 = pneg %p198
      %p515 = pneg %p195
      %p516 = pneg %p219
      %p517 = pneg %p216
      %p518 = pneg %p240
      %p519 = pneg %p237
      %p520 = pneg %p261
      %p521 = pneg %p258
      %p522 = pneg %p282
      %p523 = pneg %p279
      %p524 = pneg %p303
      %p525 = pneg %p300
      %p526 = pneg %p324
      %p527 = pneg %p321
      %p528 = pneg %p345
      %p529 = pneg %p342
      %p530 = pneg %p366
      %p531 = pneg %p363
      %p532 = pneg %p387
      %p533 = pneg %p384
      %p534 = pneg %p413
      %p535 = pneg %p410
      %p536 = scmp.lt.s32.totalorder %s30, 1
      %s537 = scalar_select %p536, %s30, 1
      %s538 = smul.addr %s537, 4
      %s539 = smul.addr %s538, 8
      %s540 = scalar_lea.vmem %s17, %s539
      %p541 = scmp.lt.s32.totalorder %s30, 1
      %s542 = scalar_select %p541, %s30, 1
      %s543 = smul.addr %s542, 4
      %s544 = smul.addr %s543, 8
      %s545 = scalar_lea.vmem %s0, %s544
      %p546 = scmp.lt.s32.totalorder %s30, 1
      %s547 = scalar_select %p546, %s30, 1
      %s548 = smul.addr %s547, 4
      %s549 = smul.addr %s548, 8
      %s550 = scalar_lea.vmem %s17, %s549
      %v551 = vld [vmem:[%s545] sm:$0xff]
      %v552 = vld [vmem:[%s545 + $0x8] sm:$0xff]
      %v553 = vld [vmem:[%s545 + $0x10] sm:$0xff]
      %v554 = vld [vmem:[%s545 + $0x18] sm:$0xff]
      %555 = vrot.lane.b32.xlu0 %v551, 23
      %v556 = vpop.permute.xlu0 %555
      %557 = vrot.lane.b32.xlu0 %v552, 23
      %v558 = vpop.permute.xlu0 %557
      %559 = vrot.lane.b32.xlu0 %v553, 23
      %v560 = vpop.permute.xlu0 %559
      %561 = vrot.lane.b32.xlu0 %v554, 23
      %v562 = vpop.permute.xlu0 %561
      %v563 = vlaneseq
      %v564 = vand.u32 %v563, 127
      %vm565 = vcmp.lt.s32.totalorder %v564, 23
      %v566 = vsel %vm565, %v560, %v562
      %v567 = vsel %vm565, %v558, %v560
      %v568 = vsel %vm565, %v556, %v558
      %v569 = vsel %vm565, %v562, %v556
      %570 = vst [vmem:[#allocation2] sm:$0xff] %v569
      %571 = vst [vmem:[#allocation2 + $0x8] sm:$0xff] %v568
      %572 = vst [vmem:[#allocation2 + $0x10] sm:$0xff] %v567
      %573 = vst [vmem:[#allocation2 + $0x18] sm:$0xff] %v566
      %574 = vrot.lane.b32.xlu0 %v551, 22
      %v575 = vpop.permute.xlu0 %574
      %576 = vrot.lane.b32.xlu0 %v552, 22
      %v577 = vpop.permute.xlu0 %576
      %578 = vrot.lane.b32.xlu0 %v553, 22
      %v579 = vpop.permute.xlu0 %578
      %580 = vrot.lane.b32.xlu0 %v554, 22
      %v581 = vpop.permute.xlu0 %580
      %vm582 = vcmp.lt.s32.totalorder %v564, 22
      %v583 = vsel %vm582, %v579, %v581
      %v584 = vsel %vm582, %v577, %v579
      %v585 = vsel %vm582, %v575, %v577
      %v586 = vsel %vm582, %v581, %v575
      %587 = vst [vmem:[#allocation2 + $0x20] sm:$0xff] %v586
      %588 = vst [vmem:[#allocation2 + $0x28] sm:$0xff] %v585
      %589 = vst [vmem:[#allocation2 + $0x30] sm:$0xff] %v584
      %590 = vst [vmem:[#allocation2 + $0x38] sm:$0xff] %v583
      %591 = vrot.lane.b32.xlu0 %v551, 21
      %v592 = vpop.permute.xlu0 %591
      %593 = vrot.lane.b32.xlu0 %v552, 21
      %v594 = vpop.permute.xlu0 %593
      %595 = vrot.lane.b32.xlu0 %v553, 21
      %v596 = vpop.permute.xlu0 %595
      %597 = vrot.lane.b32.xlu0 %v554, 21
      %v598 = vpop.permute.xlu0 %597
      %vm599 = vcmp.lt.s32.totalorder %v564, 21
      %v600 = vsel %vm599, %v596, %v598
      %v601 = vsel %vm599, %v594, %v596
      %v602 = vsel %vm599, %v592, %v594
      %v603 = vsel %vm599, %v598, %v592
      %604 = vst [vmem:[#allocation2 + $0x40] sm:$0xff] %v603
      %605 = vst [vmem:[#allocation2 + $0x48] sm:$0xff] %v602
      %606 = vst [vmem:[#allocation2 + $0x50] sm:$0xff] %v601
      %607 = vst [vmem:[#allocation2 + $0x58] sm:$0xff] %v600
      %608 = vrot.lane.b32.xlu0 %v551, 1
      %v609 = vpop.permute.xlu0 %608
      %610 = vrot.lane.b32.xlu0 %v552, 1
      %v611 = vpop.permute.xlu0 %610
      %612 = vrot.lane.b32.xlu0 %v553, 1
      %v613 = vpop.permute.xlu0 %612
      %614 = vrot.lane.b32.xlu0 %v554, 1
      %v615 = vpop.permute.xlu0 %614
      %vm616 = vcmp.lt.s32.totalorder %v564, 1
      %v617 = vsel %vm616, %v613, %v615
      %v618 = vsel %vm616, %v611, %v613
      %v619 = vsel %vm616, %v609, %v611
      %v620 = vsel %vm616, %v615, %v609
      %621 = vst [vmem:[#allocation2 + $0x60] sm:$0xff] %v620
      %622 = vst [vmem:[#allocation2 + $0x68] sm:$0xff] %v619
      %623 = vst [vmem:[#allocation2 + $0x70] sm:$0xff] %v618
      %624 = vst [vmem:[#allocation2 + $0x78] sm:$0xff] %v617
      %625 = vst [vmem:[#allocation2 + $0x80] sm:$0xff] %v551
      %626 = vst [vmem:[#allocation2 + $0x88] sm:$0xff] %v552
      %627 = vst [vmem:[#allocation2 + $0x90] sm:$0xff] %v553
      %628 = vst [vmem:[#allocation2 + $0x98] sm:$0xff] %v554
      %629 = vrot.lane.b32.xlu0 %v551, 127
      %v630 = vpop.permute.xlu0 %629
      %631 = vrot.lane.b32.xlu0 %v552, 127
      %v632 = vpop.permute.xlu0 %631
      %633 = vrot.lane.b32.xlu0 %v553, 127
      %v634 = vpop.permute.xlu0 %633
      %635 = vrot.lane.b32.xlu0 %v554, 127
      %v636 = vpop.permute.xlu0 %635
      %vm637 = vcmp.lt.s32.totalorder %v564, 127
      %v638 = vsel %vm637, %v634, %v636
      %v639 = vsel %vm637, %v632, %v634
      %v640 = vsel %vm637, %v630, %v632
      %v641 = vsel %vm637, %v636, %v630
      %642 = vst [vmem:[#allocation2 + $0xa0] sm:$0xff] %v640
      %643 = vst [vmem:[#allocation2 + $0xa8] sm:$0xff] %v639
      %644 = vst [vmem:[#allocation2 + $0xb0] sm:$0xff] %v638
      %645 = vst [vmem:[#allocation2 + $0xb8] sm:$0xff] %v641
      %646 = vrot.lane.b32.xlu0 %v551, 107
      %v647 = vpop.permute.xlu0 %646
      %648 = vrot.lane.b32.xlu0 %v552, 107
      %v649 = vpop.permute.xlu0 %648
      %650 = vrot.lane.b32.xlu0 %v553, 107
      %v651 = vpop.permute.xlu0 %650
      %652 = vrot.lane.b32.xlu0 %v554, 107
      %v653 = vpop.permute.xlu0 %652
      %vm654 = vcmp.lt.s32.totalorder %v564, 107
      %v655 = vsel %vm654, %v651, %v653
      %v656 = vsel %vm654, %v649, %v651
      %v657 = vsel %vm654, %v647, %v649
      %v658 = vsel %vm654, %v653, %v647
      %659 = vst [vmem:[#allocation2 + $0xc0] sm:$0xff] %v657
      %660 = vst [vmem:[#allocation2 + $0xc8] sm:$0xff] %v656
      %661 = vst [vmem:[#allocation2 + $0xd0] sm:$0xff] %v655
      %662 = vst [vmem:[#allocation2 + $0xd8] sm:$0xff] %v658
      %663 = vrot.lane.b32.xlu0 %v551, 106
      %v664 = vpop.permute.xlu0 %663
      %665 = vrot.lane.b32.xlu0 %v552, 106
      %v666 = vpop.permute.xlu0 %665
      %667 = vrot.lane.b32.xlu0 %v553, 106
      %v668 = vpop.permute.xlu0 %667
      %669 = vrot.lane.b32.xlu0 %v554, 106
      %v670 = vpop.permute.xlu0 %669
      %vm671 = vcmp.lt.s32.totalorder %v564, 106
      %v672 = vsel %vm671, %v668, %v670
      %v673 = vsel %vm671, %v666, %v668
      %v674 = vsel %vm671, %v664, %v666
      %v675 = vsel %vm671, %v670, %v664
      %676 = vst [vmem:[#allocation2 + $0xe0] sm:$0xff] %v674
      %677 = vst [vmem:[#allocation2 + $0xe8] sm:$0xff] %v673
      %678 = vst [vmem:[#allocation2 + $0xf0] sm:$0xff] %v672
      %679 = vst [vmem:[#allocation2 + $0xf8] sm:$0xff] %v675
      %680 = vrot.lane.b32.xlu0 %v551, 105
      %v681 = vpop.permute.xlu0 %680
      %682 = vrot.lane.b32.xlu0 %v552, 105
      %v683 = vpop.permute.xlu0 %682
      %684 = vrot.lane.b32.xlu0 %v553, 105
      %v685 = vpop.permute.xlu0 %684
      %686 = vrot.lane.b32.xlu0 %v554, 105
      %v687 = vpop.permute.xlu0 %686
      %vm688 = vcmp.lt.s32.totalorder %v564, 105
      %v689 = vsel %vm688, %v685, %v687
      %v690 = vsel %vm688, %v683, %v685
      %v691 = vsel %vm688, %v681, %v683
      %v692 = vsel %vm688, %v687, %v681
      %693 = vst [vmem:[#allocation2 + $0x100] sm:$0xff] %v691
      %694 = vst [vmem:[#allocation2 + $0x108] sm:$0xff] %v690
      %695 = vst [vmem:[#allocation2 + $0x110] sm:$0xff] %v689
      %696 = vst [vmem:[#allocation2 + $0x118] sm:$0xff] %v692
      %v697 = vld [vmem:[%s4] sm:$0xf]
      %v698 = vld [vmem:[#allocation2] sm:$0xff]
      %v699 = vld [vmem:[#allocation2 + $0x8] sm:$0xff]
      %v700 = vld [vmem:[#allocation2 + $0x10] sm:$0xff]
      %v701 = vld [vmem:[#allocation2 + $0x18] sm:$0xff]
      %v702 = vld [vmem:[#allocation2 + $0x20] sm:$0xff]
      %v703 = vld [vmem:[#allocation2 + $0x28] sm:$0xff]
      %v704 = vld [vmem:[#allocation2 + $0x30] sm:$0xff]
      %v705 = vld [vmem:[#allocation2 + $0x38] sm:$0xff]
      %v706 = vld [vmem:[#allocation2 + $0x40] sm:$0xff]
      %v707 = vld [vmem:[#allocation2 + $0x48] sm:$0xff]
      %v708 = vld [vmem:[#allocation2 + $0x50] sm:$0xff]
      %v709 = vld [vmem:[#allocation2 + $0x58] sm:$0xff]
      %v710 = vld [vmem:[#allocation2 + $0x60] sm:$0xff]
      %v711 = vld [vmem:[#allocation2 + $0x68] sm:$0xff]
      %v712 = vld [vmem:[#allocation2 + $0x70] sm:$0xff]
      %v713 = vld [vmem:[#allocation2 + $0x78] sm:$0xff]
      %v714 = vld [vmem:[#allocation2 + $0x80] sm:$0xff]
      %v715 = vld [vmem:[#allocation2 + $0x88] sm:$0xff]
      %v716 = vld [vmem:[#allocation2 + $0x90] sm:$0xff]
      %v717 = vld [vmem:[#allocation2 + $0x98] sm:$0xff]
      %v718 = vld [vmem:[#allocation2 + $0xa0] sm:$0xff]
      %v719 = vld [vmem:[#allocation2 + $0xa8] sm:$0xff]
      %v720 = vld [vmem:[#allocation2 + $0xb0] sm:$0xff]
      %v721 = vld [vmem:[#allocation2 + $0xb8] sm:$0xff]
      %v722 = vld [vmem:[#allocation2 + $0xc0] sm:$0xff]
      %v723 = vld [vmem:[#allocation2 + $0xc8] sm:$0xff]
      %v724 = vld [vmem:[#allocation2 + $0xd0] sm:$0xff]
      %v725 = vld [vmem:[#allocation2 + $0xd8] sm:$0xff]
      %v726 = vld [vmem:[#allocation2 + $0xe0] sm:$0xff]
      %v727 = vld [vmem:[#allocation2 + $0xe8] sm:$0xff]
      %v728 = vld [vmem:[#allocation2 + $0xf0] sm:$0xff]
      %v729 = vld [vmem:[#allocation2 + $0xf8] sm:$0xff]
      %v730 = vld [vmem:[#allocation2 + $0x100] sm:$0xff]
      %v731 = vld [vmem:[#allocation2 + $0x108] sm:$0xff]
      %v732 = vld [vmem:[#allocation2 + $0x110] sm:$0xff]
      %v733 = vld [vmem:[#allocation2 + $0x118] sm:$0xff]
      %vm734 = vcmask 588800
      %v736 = vsel %vm734, %v697, 0
      %738 = vmatprep.subr.mxu0 0.0
      %739 = vmatpush1.msra.mxu0 0.0
      %740 = vmatprep.subr.mxu0 0.0
      %741 = vmatpush1.msra.mxu0 0.0
      %742 = vmatprep.subr.mxu0 0.0
      %743 = vmatpush1.msra.mxu0 0.0
      %744 = vmatprep.subr.mxu0 0.0
      %745 = vmatpush1.msra.mxu0 0.0
      %746 = vmatprep.subr.mxu0 0.0
      %747 = vmatpush1.msra.mxu0 0.0
      %748 = vmatprep.subr.mxu0 0.0
      %749 = vmatpush1.msra.mxu0 0.0
      %750 = vmatprep.subr.mxu0 0.0
      %751 = vmatpush1.msra.mxu0 0.0
      %752 = vmatprep.subr.mxu0 %v731
      %753 = vmatpush1.msra.mxu0 %v730
      %754 = vmatprep.subr.mxu0 %v727
      %755 = vmatpush1.msra.mxu0 %v726
      %756 = vmatprep.subr.mxu0 %v723
      %757 = vmatpush1.msra.mxu0 %v722
      %758 = vmatprep.subr.mxu0 %v719
      %759 = vmatpush1.msra.mxu0 %v718
      %760 = vmatprep.subr.mxu0 %v715
      %761 = vmatpush1.msra.mxu0 %v714
      %762 = vmatprep.subr.mxu0 %v711
      %763 = vmatpush1.msra.mxu0 %v710
      %764 = vmatprep.subr.mxu0 %v707
      %765 = vmatpush1.msra.mxu0 %v706
      %766 = vmatprep.subr.mxu0 %v703
      %767 = vmatpush1.msra.mxu0 %v702
      %768 = vmatprep.subr.mxu0 %v699
      %769 = vmatpush1.msra.mxu0 %v698
      %770 = vmatprep.subr.mxu0 0.0
      %771 = vmatpush2.msra.mxu0 0.0
      %772 = vmatprep.subr.mxu0 0.0
      %773 = vmatpush2.msra.mxu0 0.0
      %774 = vmatprep.subr.mxu0 0.0
      %775 = vmatpush2.msra.mxu0 0.0
      %776 = vmatprep.subr.mxu0 0.0
      %777 = vmatpush2.msra.mxu0 0.0
      %778 = vmatprep.subr.mxu0 0.0
      %779 = vmatpush2.msra.mxu0 0.0
      %780 = vmatprep.subr.mxu0 0.0
      %781 = vmatpush2.msra.mxu0 0.0
      %782 = vmatprep.subr.mxu0 0.0
      %783 = vmatpush2.msra.mxu0 0.0
      %784 = vmatprep.subr.mxu0 0.0
      %785 = vmatpush2.msra.mxu0 0.0
      %786 = vmatprep.subr.mxu0 0.0
      %787 = vmatpush2.msra.mxu0 0.0
      %788 = vmatprep.subr.mxu0 0.0
      %789 = vmatpush2.msra.mxu0 0.0
      %790 = vmatprep.subr.mxu0 0.0
      %791 = vmatpush2.msra.mxu0 0.0
      %792 = vmatprep.subr.mxu0 0.0
      %793 = vmatpush2.msra.mxu0 0.0
      %794 = vmatprep.subr.mxu0 0.0
      %795 = vmatpush2.msra.mxu0 0.0
      %796 = vmatprep.subr.mxu0 0.0
      %797 = vmatpush2.msra.mxu0 0.0
      %798 = vmatprep.subr.mxu0 0.0
      %799 = vmatpush2.msra.mxu0 0.0
      %800 = vmatprep.subr.mxu0 0.0
      %801 = vmatpush2.msra.mxu0 0.0
      %802 = vmatprep.mubr.f32.mxu0 0.0
      %803 = vmatmul.mubr.f32.gmra.mxu0 %v736
      %v804 = vpop.f32.mrf.mxu0
      %v805 = vadd.f32 0.0, %v804
      %v806 = vpop.f32.mrf.mxu0
      %v807 = vadd.f32 0.0, %v806
      %808 = vdwg.mxu0
      %809 = vmatprep.subr.mxu0 0.0
      %810 = vmatpush1.msra.mxu0 0.0
      %811 = vmatprep.subr.mxu0 0.0
      %812 = vmatpush1.msra.mxu0 0.0
      %813 = vmatprep.subr.mxu0 0.0
      %814 = vmatpush1.msra.mxu0 0.0
      %815 = vmatprep.subr.mxu0 0.0
      %816 = vmatpush1.msra.mxu0 0.0
      %817 = vmatprep.subr.mxu0 0.0
      %818 = vmatpush1.msra.mxu0 0.0
      %819 = vmatprep.subr.mxu0 0.0
      %820 = vmatpush1.msra.mxu0 0.0
      %821 = vmatprep.subr.mxu0 0.0
      %822 = vmatpush1.msra.mxu0 0.0
      %823 = vmatprep.subr.mxu0 %v733
      %824 = vmatpush1.msra.mxu0 %v732
      %825 = vmatprep.subr.mxu0 %v729
      %826 = vmatpush1.msra.mxu0 %v728
      %827 = vmatprep.subr.mxu0 %v725
      %828 = vmatpush1.msra.mxu0 %v724
      %829 = vmatprep.subr.mxu0 %v721
      %830 = vmatpush1.msra.mxu0 %v720
      %831 = vmatprep.subr.mxu0 %v717
      %832 = vmatpush1.msra.mxu0 %v716
      %833 = vmatprep.subr.mxu0 %v713
      %834 = vmatpush1.msra.mxu0 %v712
      %835 = vmatprep.subr.mxu0 %v709
      %836 = vmatpush1.msra.mxu0 %v708
      %837 = vmatprep.subr.mxu0 %v705
      %838 = vmatpush1.msra.mxu0 %v704
      %839 = vmatprep.subr.mxu0 %v701
      %840 = vmatpush1.msra.mxu0 %v700
      %841 = vmatprep.subr.mxu0 0.0
      %842 = vmatpush2.msra.mxu0 0.0
      %843 = vmatprep.subr.mxu0 0.0
      %844 = vmatpush2.msra.mxu0 0.0
      %845 = vmatprep.subr.mxu0 0.0
      %846 = vmatpush2.msra.mxu0 0.0
      %847 = vmatprep.subr.mxu0 0.0
      %848 = vmatpush2.msra.mxu0 0.0
      %849 = vmatprep.subr.mxu0 0.0
      %850 = vmatpush2.msra.mxu0 0.0
      %851 = vmatprep.subr.mxu0 0.0
      %852 = vmatpush2.msra.mxu0 0.0
      %853 = vmatprep.subr.mxu0 0.0
      %854 = vmatpush2.msra.mxu0 0.0
      %855 = vmatprep.subr.mxu0 0.0
      %856 = vmatpush2.msra.mxu0 0.0
      %857 = vmatprep.subr.mxu0 0.0
      %858 = vmatpush2.msra.mxu0 0.0
      %859 = vmatprep.subr.mxu0 0.0
      %860 = vmatpush2.msra.mxu0 0.0
      %861 = vmatprep.subr.mxu0 0.0
      %862 = vmatpush2.msra.mxu0 0.0
      %863 = vmatprep.subr.mxu0 0.0
      %864 = vmatpush2.msra.mxu0 0.0
      %865 = vmatprep.subr.mxu0 0.0
      %866 = vmatpush2.msra.mxu0 0.0
      %867 = vmatprep.subr.mxu0 0.0
      %868 = vmatpush2.msra.mxu0 0.0
      %869 = vmatprep.subr.mxu0 0.0
      %870 = vmatpush2.msra.mxu0 0.0
      %871 = vmatprep.subr.mxu0 0.0
      %872 = vmatpush2.msra.mxu0 0.0
      %873 = vmatprep.mubr.f32.mxu0 0.0
      %874 = vmatmul.mubr.f32.gmra.mxu0 %v736
      %v875 = vpop.f32.mrf.mxu0
      %v876 = vadd.f32 0.0, %v875
      %v877 = vpop.f32.mrf.mxu0
      %v878 = vadd.f32 0.0, %v877
      %879 = vdwg.mxu0
      %v880 = vld [vmem:[%s5] sm:$0xf]
      %882 = vset.pattern.permute.xlu0 0
      %883 = vperm.xlu0 %882, %v880
      %v884 = vpop.permute.xlu0 %883
      %v886 = vmul.f32 %v805, %v884
      %v887 = vmul.f32 %v807, %v884
      %v888 = vmul.f32 %v876, %v884
      %v889 = vmul.f32 %v878, %v884
      %v890 = vld [vmem:[%s6] sm:$0xf]
      %892 = vset.pattern.permute.xlu0 0
      %893 = vperm.xlu0 %892, %v890
      %v894 = vpop.permute.xlu0 %893
      %v896 = vadd.f32 %v886, %v894
      %v897 = vadd.f32 %v887, %v894
      %v898 = vadd.f32 %v888, %v894
      %v899 = vadd.f32 %v889, %v894
      %v900 = vxor.u32 %v896, 2147483648
      %v901 = vxor.u32 %v897, 2147483648
      %v902 = vxor.u32 %v898, 2147483648
      %v903 = vxor.u32 %v899, 2147483648
      %v904 = vmul.f32 %v900, 1.442695
      %v905 = vpow.pop %v904
      %v906 = vmul.f32 %v901, 1.442695
      %v907 = vpow.pop %v906
      %v908 = vmul.f32 %v902, 1.442695
      %v909 = vpow.pop %v908
      %v910 = vmul.f32 %v903, 1.442695
      %v911 = vpow.pop %v910
      %v912 = vadd.f32 %v905, 1.0
      %v913 = vadd.f32 %v907, 1.0
      %v914 = vadd.f32 %v909, 1.0
      %v915 = vadd.f32 %v911, 1.0
      %v916 = vrcp.pop %v912
      %v917 = vmul.f32 1.0, %v916
      %v918 = vrcp.pop %v913
      %v919 = vmul.f32 1.0, %v918
      %v920 = vrcp.pop %v914
      %v921 = vmul.f32 1.0, %v920
      %v922 = vrcp.pop %v915
      %v923 = vmul.f32 1.0, %v922
      %v924 = vmul.f32 %v896, %v917
      %v925 = vmul.f32 %v897, %v919
      %v926 = vmul.f32 %v898, %v921
      %v927 = vmul.f32 %v899, %v923
      %v928 = vld [vmem:[%s1] sm:$0xf]
      %v930 = vlaneseq
      %v931 = vshrl.u32 %v930, 7
      %v932 = vsub.s32 0, %v931
      %v933 = vrot.slane %v928, %v932
      %v934 = vlaneseq
      %v935 = vshrl.u32 %v934, 7
      %v936 = vsub.s32 1, %v935
      %v937 = vrot.slane %v928, %v936
      %v938 = vlaneseq
      %v939 = vshrl.u32 %v938, 7
      %v940 = vsub.s32 2, %v939
      %v941 = vrot.slane %v928, %v940
      %v942 = vlaneseq
      %v943 = vshrl.u32 %v942, 7
      %v944 = vsub.s32 3, %v943
      %v945 = vrot.slane %v928, %v944
      %v950 = vmul.f32 %v924, %v933
      %v951 = vmul.f32 %v925, %v937
      %v952 = vmul.f32 %v926, %v941
      %v953 = vmul.f32 %v927, %v945
      %vm954 = vcmask 1043456
      %v955 = vsel %vm954, %v950, 0.0
      %v956 = vsel %vm954, %v951, 0.0
      %v957 = vadd.f32 %v955, %v956
      %v958 = vsel %vm954, %v952, 0.0
      %v959 = vadd.f32 %v957, %v958
      %v960 = vsel %vm954, %v953, 0.0
      %v961 = vadd.f32 %v959, %v960
      %962 = vadd.xlane.f32.xlu0 %v961
      %v963 = vpop.xlane.xlu0 %962
      %v964 = vmul.f32 %v963, 0.00390625
      %v965 = vld [vmem:[%s7] sm:$0xf]
      %v966 = vld [vmem:[%s8] sm:$0xf]
      %vm967 = vcmask 31744
      %v969 = vsel %vm967, %v965, 0
      %v972 = vsel %vm954, %v964, 0
      %974 = vmatprep.subr.mxu0 0.0
      %975 = vmatpush1.msra.mxu0 0.0
      %976 = vmatprep.subr.mxu0 0.0
      %977 = vmatpush1.msra.mxu0 0.0
      %978 = vmatprep.subr.mxu0 0.0
      %979 = vmatpush1.msra.mxu0 0.0
      %980 = vmatprep.subr.mxu0 0.0
      %981 = vmatpush1.msra.mxu0 0.0
      %982 = vmatprep.subr.mxu0 0.0
      %983 = vmatpush1.msra.mxu0 0.0
      %984 = vmatprep.subr.mxu0 0.0
      %985 = vmatpush1.msra.mxu0 0.0
      %986 = vmatprep.subr.mxu0 0.0
      %987 = vmatpush1.msra.mxu0 0.0
      %988 = vmatprep.subr.mxu0 0.0
      %989 = vmatpush1.msra.mxu0 0.0
      %990 = vmatprep.subr.mxu0 0.0
      %991 = vmatpush1.msra.mxu0 0.0
      %992 = vmatprep.subr.mxu0 0.0
      %993 = vmatpush1.msra.mxu0 0.0
      %994 = vmatprep.subr.mxu0 0.0
      %995 = vmatpush1.msra.mxu0 0.0
      %996 = vmatprep.subr.mxu0 0.0
      %997 = vmatpush1.msra.mxu0 0.0
      %998 = vmatprep.subr.mxu0 0.0
      %999 = vmatpush1.msra.mxu0 0.0
      %1000 = vmatprep.subr.mxu0 0.0
      %1001 = vmatpush1.msra.mxu0 0.0
      %1002 = vmatprep.subr.mxu0 0.0
      %1003 = vmatpush1.msra.mxu0 0.0
      %1004 = vmatprep.subr.mxu0 0.0
      %1005 = vmatpush1.msra.mxu0 %v972
      %1006 = vmatprep.subr.mxu0 0.0
      %1007 = vmatpush2.msra.mxu0 0.0
      %1008 = vmatprep.subr.mxu0 0.0
      %1009 = vmatpush2.msra.mxu0 0.0
      %1010 = vmatprep.subr.mxu0 0.0
      %1011 = vmatpush2.msra.mxu0 0.0
      %1012 = vmatprep.subr.mxu0 0.0
      %1013 = vmatpush2.msra.mxu0 0.0
      %1014 = vmatprep.subr.mxu0 0.0
      %1015 = vmatpush2.msra.mxu0 0.0
      %1016 = vmatprep.subr.mxu0 0.0
      %1017 = vmatpush2.msra.mxu0 0.0
      %1018 = vmatprep.subr.mxu0 0.0
      %1019 = vmatpush2.msra.mxu0 0.0
      %1020 = vmatprep.subr.mxu0 0.0
      %1021 = vmatpush2.msra.mxu0 0.0
      %1022 = vmatprep.subr.mxu0 0.0
      %1023 = vmatpush2.msra.mxu0 0.0
      %1024 = vmatprep.subr.mxu0 0.0
      %1025 = vmatpush2.msra.mxu0 0.0
      %1026 = vmatprep.subr.mxu0 0.0
      %1027 = vmatpush2.msra.mxu0 0.0
      %1028 = vmatprep.subr.mxu0 0.0
      %1029 = vmatpush2.msra.mxu0 0.0
      %1030 = vmatprep.subr.mxu0 0.0
      %1031 = vmatpush2.msra.mxu0 0.0
      %1032 = vmatprep.subr.mxu0 0.0
      %1033 = vmatpush2.msra.mxu0 0.0
      %1034 = vmatprep.subr.mxu0 0.0
      %1035 = vmatpush2.msra.mxu0 0.0
      %1036 = vmatprep.subr.mxu0 0.0
      %1037 = vmatpush2.msra.mxu0 0.0
      %1038 = vmatprep.mubr.f32.mxu0 0.0
      %1039 = vmatmul.mubr.f32.gmra.mxu0 %v969
      %v1040 = vpop.f32.mrf.mxu0
      %v1041 = vadd.f32 %v966, %v1040
      %v1042 = vpop.f32.mrf.mxu0
      %1043 = vdwg.mxu0
      %1045 = vset.pattern.permute.xlu0 0
      %1046 = vperm.xlu0 %1045, %v1041
      %v1047 = vpop.permute.xlu0 %1046
      %v1049 = vadd.f32 %v924, %v1047
      %v1050 = vadd.f32 %v925, %v1047
      %v1051 = vadd.f32 %v926, %v1047
      %v1052 = vadd.f32 %v927, %v1047
      %v1053 = vmul.f32 %v1049, %v933
      %v1054 = vmul.f32 %v1050, %v937
      %v1055 = vmul.f32 %v1051, %v941
      %v1056 = vmul.f32 %v1052, %v945
      %v1057 = vld [vmem:[%s9] sm:$0xf]
      %1059 = vset.pattern.permute.xlu0 0
      %1060 = vperm.xlu0 %1059, %v1057
      %v1061 = vpop.permute.xlu0 %1060
      %v1063 = vmul.f32 %v1053, %v1061
      %v1064 = vmul.f32 %v1054, %v1061
      %v1065 = vmul.f32 %v1055, %v1061
      %v1066 = vmul.f32 %v1056, %v1061
      %v1067 = vsel %vm954, %v1063, 0.0
      %v1068 = vrot.slane %v1067, 4
      %v1069 = vadd.f32 %v1067, %v1068
      %v1070 = vrot.slane %v1069, 2
      %v1071 = vadd.f32 %v1069, %v1070
      %v1072 = vrot.slane %v1071, 1
      %v1073 = vadd.f32 %v1071, %v1072
      %v1074 = vsel %vm954, %v1064, 0.0
      %v1075 = vrot.slane %v1074, 4
      %v1076 = vadd.f32 %v1074, %v1075
      %v1077 = vrot.slane %v1076, 2
      %v1078 = vadd.f32 %v1076, %v1077
      %v1079 = vrot.slane %v1078, 1
      %v1080 = vadd.f32 %v1078, %v1079
      %v1081 = vsel %vm954, %v1065, 0.0
      %v1082 = vrot.slane %v1081, 4
      %v1083 = vadd.f32 %v1081, %v1082
      %v1084 = vrot.slane %v1083, 2
      %v1085 = vadd.f32 %v1083, %v1084
      %v1086 = vrot.slane %v1085, 1
      %v1087 = vadd.f32 %v1085, %v1086
      %v1088 = vsel %vm954, %v1066, 0.0
      %v1089 = vrot.slane %v1088, 4
      %v1090 = vadd.f32 %v1088, %v1089
      %v1091 = vrot.slane %v1090, 2
      %v1092 = vadd.f32 %v1090, %v1091
      %v1093 = vrot.slane %v1092, 1
      %v1094 = vadd.f32 %v1092, %v1093
      %v1095 = vld [vmem:[%s2] ss:$8 sm:$0xf]
      %1096 = vrot.lane.b32.xlu0 %v1073, 2
      %v1097 = vpop.permute.xlu0 %1096
      %1098 = vrot.lane.b32.xlu0 %v1080, 2
      %v1099 = vpop.permute.xlu0 %1098
      %1100 = vrot.lane.b32.xlu0 %v1087, 2
      %v1101 = vpop.permute.xlu0 %1100
      %1102 = vrot.lane.b32.xlu0 %v1094, 2
      %v1103 = vpop.permute.xlu0 %1102
      %vm1104 = vcmp.lt.s32.totalorder %v564, 2
      %v1105 = vsel %vm1104, %v1101, %v1103
      %v1106 = vsel %vm1104, %v1099, %v1101
      %v1107 = vsel %vm1104, %v1097, %v1099
      %v1108 = vsel %vm1104, %v1103, %v1097
      %v1113 = vcombine.low %v1108, %v1107
      %v1114 = vcombine.low %v1106, %v1105
      %v1116 = vunpack.c.l.s4 1966171168
      %v1117 = vunpack.c.0.s8 %v1116
      %v1118 = vlaneseq
      %v1119 = vshrl.u32 %v1118, 7
      %v1120 = vsub.s32 %v1117, %v1119
      %v1121 = vrot.slane %v1113, %v1120
      %v1123 = vunpack.c.l.s4 1966171168
      %v1124 = vunpack.c.0.s8 %v1123
      %v1125 = vlaneseq
      %v1126 = vshrl.u32 %v1125, 7
      %v1127 = vsub.s32 %v1124, %v1126
      %v1128 = vrot.slane %v1114, %v1127
      %v1129 = vcombine.low %v1121, %v1128
      %v1131 = vunpack.c.l.s4 1966171168
      %v1132 = vunpack.c.0.s8 %v1131
      %v1133 = vlaneseq
      %v1134 = vshrl.u32 %v1133, 7
      %v1135 = vsub.s32 %v1132, %v1134
      %v1136 = vrot.slane %v1129, %v1135
      %v1138 = vmul.f32 %v1095, %v1136
      %s1139 = scalar_lea.vmem %s2, 1
      %v1140 = vld [vmem:[%s1139] ss:$8 sm:$0xf]
      %1141 = vrot.lane.b32.xlu0 %v1073, 1
      %v1142 = vpop.permute.xlu0 %1141
      %1143 = vrot.lane.b32.xlu0 %v1080, 1
      %v1144 = vpop.permute.xlu0 %1143
      %1145 = vrot.lane.b32.xlu0 %v1087, 1
      %v1146 = vpop.permute.xlu0 %1145
      %1147 = vrot.lane.b32.xlu0 %v1094, 1
      %v1148 = vpop.permute.xlu0 %1147
      %v1149 = vsel %vm616, %v1146, %v1148
      %v1150 = vsel %vm616, %v1144, %v1146
      %v1151 = vsel %vm616, %v1142, %v1144
      %v1152 = vsel %vm616, %v1148, %v1142
      %v1157 = vcombine.low %v1152, %v1151
      %v1158 = vcombine.low %v1150, %v1149
      %v1160 = vunpack.c.l.s4 1966171168
      %v1161 = vunpack.c.0.s8 %v1160
      %v1162 = vlaneseq
      %v1163 = vshrl.u32 %v1162, 7
      %v1164 = vsub.s32 %v1161, %v1163
      %v1165 = vrot.slane %v1157, %v1164
      %v1167 = vunpack.c.l.s4 1966171168
      %v1168 = vunpack.c.0.s8 %v1167
      %v1169 = vlaneseq
      %v1170 = vshrl.u32 %v1169, 7
      %v1171 = vsub.s32 %v1168, %v1170
      %v1172 = vrot.slane %v1158, %v1171
      %v1173 = vcombine.low %v1165, %v1172
      %v1175 = vunpack.c.l.s4 1966171168
      %v1176 = vunpack.c.0.s8 %v1175
      %v1177 = vlaneseq
      %v1178 = vshrl.u32 %v1177, 7
      %v1179 = vsub.s32 %v1176, %v1178
      %v1180 = vrot.slane %v1173, %v1179
      %v1182 = vmul.f32 %v1140, %v1180
      %v1183 = vadd.f32 %v1138, %v1182
      %s1184 = scalar_lea.vmem %s2, 2
      %v1185 = vld [vmem:[%s1184] ss:$8 sm:$0xf]
      %v1190 = vcombine.low %v1073, %v1080
      %v1191 = vcombine.low %v1087, %v1094
      %v1193 = vunpack.c.l.s4 1966171168
      %v1194 = vunpack.c.0.s8 %v1193
      %v1195 = vlaneseq
      %v1196 = vshrl.u32 %v1195, 7
      %v1197 = vsub.s32 %v1194, %v1196
      %v1198 = vrot.slane %v1190, %v1197
      %v1200 = vunpack.c.l.s4 1966171168
      %v1201 = vunpack.c.0.s8 %v1200
      %v1202 = vlaneseq
      %v1203 = vshrl.u32 %v1202, 7
      %v1204 = vsub.s32 %v1201, %v1203
      %v1205 = vrot.slane %v1191, %v1204
      %v1206 = vcombine.low %v1198, %v1205
      %v1208 = vunpack.c.l.s4 1966171168
      %v1209 = vunpack.c.0.s8 %v1208
      %v1210 = vlaneseq
      %v1211 = vshrl.u32 %v1210, 7
      %v1212 = vsub.s32 %v1209, %v1211
      %v1213 = vrot.slane %v1206, %v1212
      %v1215 = vmul.f32 %v1185, %v1213
      %v1216 = vadd.f32 %v1183, %v1215
      %s1217 = scalar_lea.vmem %s2, 3
      %v1218 = vld [vmem:[%s1217] ss:$8 sm:$0xf]
      %1219 = vrot.lane.b32.xlu0 %v1073, 127
      %v1220 = vpop.permute.xlu0 %1219
      %1221 = vrot.lane.b32.xlu0 %v1080, 127
      %v1222 = vpop.permute.xlu0 %1221
      %1223 = vrot.lane.b32.xlu0 %v1087, 127
      %v1224 = vpop.permute.xlu0 %1223
      %1225 = vrot.lane.b32.xlu0 %v1094, 127
      %v1226 = vpop.permute.xlu0 %1225
      %v1227 = vsel %vm637, %v1224, %v1226
      %v1228 = vsel %vm637, %v1222, %v1224
      %v1229 = vsel %vm637, %v1220, %v1222
      %v1230 = vsel %vm637, %v1226, %v1220
      %v1235 = vcombine.low %v1229, %v1228
      %v1236 = vcombine.low %v1227, %v1230
      %v1238 = vunpack.c.l.s4 1966171168
      %v1239 = vunpack.c.0.s8 %v1238
      %v1240 = vlaneseq
      %v1241 = vshrl.u32 %v1240, 7
      %v1242 = vsub.s32 %v1239, %v1241
      %v1243 = vrot.slane %v1235, %v1242
      %v1245 = vunpack.c.l.s4 1966171168
      %v1246 = vunpack.c.0.s8 %v1245
      %v1247 = vlaneseq
      %v1248 = vshrl.u32 %v1247, 7
      %v1249 = vsub.s32 %v1246, %v1248
      %v1250 = vrot.slane %v1236, %v1249
      %v1251 = vcombine.low %v1243, %v1250
      %v1253 = vunpack.c.l.s4 1966171168
      %v1254 = vunpack.c.0.s8 %v1253
      %v1255 = vlaneseq
      %v1256 = vshrl.u32 %v1255, 7
      %v1257 = vsub.s32 %v1254, %v1256
      %v1258 = vrot.slane %v1251, %v1257
      %v1260 = vmul.f32 %v1218, %v1258
      %v1261 = vadd.f32 %v1216, %v1260
      %s1262 = scalar_lea.vmem %s2, 4
      %v1263 = vld [vmem:[%s1262] ss:$8 sm:$0xf]
      %1264 = vrot.lane.b32.xlu0 %v1073, 126
      %v1265 = vpop.permute.xlu0 %1264
      %1266 = vrot.lane.b32.xlu0 %v1080, 126
      %v1267 = vpop.permute.xlu0 %1266
      %1268 = vrot.lane.b32.xlu0 %v1087, 126
      %v1269 = vpop.permute.xlu0 %1268
      %1270 = vrot.lane.b32.xlu0 %v1094, 126
      %v1271 = vpop.permute.xlu0 %1270
      %vm1272 = vcmp.lt.s32.totalorder %v564, 126
      %v1273 = vsel %vm1272, %v1269, %v1271
      %v1274 = vsel %vm1272, %v1267, %v1269
      %v1275 = vsel %vm1272, %v1265, %v1267
      %v1276 = vsel %vm1272, %v1271, %v1265
      %v1281 = vcombine.low %v1275, %v1274
      %v1282 = vcombine.low %v1273, %v1276
      %v1284 = vunpack.c.l.s4 1966171168
      %v1285 = vunpack.c.0.s8 %v1284
      %v1286 = vlaneseq
      %v1287 = vshrl.u32 %v1286, 7
      %v1288 = vsub.s32 %v1285, %v1287
      %v1289 = vrot.slane %v1281, %v1288
      %v1291 = vunpack.c.l.s4 1966171168
      %v1292 = vunpack.c.0.s8 %v1291
      %v1293 = vlaneseq
      %v1294 = vshrl.u32 %v1293, 7
      %v1295 = vsub.s32 %v1292, %v1294
      %v1296 = vrot.slane %v1282, %v1295
      %v1297 = vcombine.low %v1289, %v1296
      %v1299 = vunpack.c.l.s4 1966171168
      %v1300 = vunpack.c.0.s8 %v1299
      %v1301 = vlaneseq
      %v1302 = vshrl.u32 %v1301, 7
      %v1303 = vsub.s32 %v1300, %v1302
      %v1304 = vrot.slane %v1297, %v1303
      %v1306 = vmul.f32 %v1263, %v1304
      %v1307 = vadd.f32 %v1261, %v1306
      %v1308 = vld [vmem:[%s3] ss:$8 sm:$0xf]
      %v1310 = vlaneseq
      %v1311 = vshrl.u32 %v1310, 7
      %v1312 = vsub.s32 0, %v1311
      %v1313 = vrot.slane %v1307, %v1312
      %v1314 = vlaneseq
      %v1315 = vshrl.u32 %v1314, 7
      %v1316 = vsub.s32 1, %v1315
      %v1317 = vrot.slane %v1307, %v1316
      %v1318 = vlaneseq
      %v1319 = vshrl.u32 %v1318, 7
      %v1320 = vsub.s32 2, %v1319
      %v1321 = vrot.slane %v1307, %v1320
      %v1322 = vlaneseq
      %v1323 = vshrl.u32 %v1322, 7
      %v1324 = vsub.s32 3, %v1323
      %v1325 = vrot.slane %v1307, %v1324
      %1330 = vrot.lane.b32.xlu0 %v1313, 44
      %v1331 = vpop.permute.xlu0 %1330
      %1332 = vrot.lane.b32.xlu0 %v1317, 44
      %v1333 = vpop.permute.xlu0 %1332
      %1334 = vrot.lane.b32.xlu0 %v1321, 44
      %v1335 = vpop.permute.xlu0 %1334
      %1336 = vrot.lane.b32.xlu0 %v1325, 44
      %v1337 = vpop.permute.xlu0 %1336
      %vm1338 = vcmp.lt.s32.totalorder %v564, 44
      %v1339 = vsel %vm1338, %v1335, %v1337
      %v1340 = vsel %vm1338, %v1333, %v1335
      %v1341 = vsel %vm1338, %v1331, %v1333
      %v1342 = vsel %vm1338, %v1337, %v1331
      %v1347 = vcombine.low %v1342, %v1341
      %v1348 = vcombine.low %v1340, %v1339
      %v1350 = vunpack.c.l.s4 1966171168
      %v1351 = vunpack.c.0.s8 %v1350
      %v1352 = vlaneseq
      %v1353 = vshrl.u32 %v1352, 7
      %v1354 = vsub.s32 %v1351, %v1353
      %v1355 = vrot.slane %v1347, %v1354
      %v1357 = vunpack.c.l.s4 1966171168
      %v1358 = vunpack.c.0.s8 %v1357
      %v1359 = vlaneseq
      %v1360 = vshrl.u32 %v1359, 7
      %v1361 = vsub.s32 %v1358, %v1360
      %v1362 = vrot.slane %v1348, %v1361
      %v1363 = vcombine.low %v1355, %v1362
      %v1365 = vunpack.c.l.s4 1966171168
      %v1366 = vunpack.c.0.s8 %v1365
      %v1367 = vlaneseq
      %v1368 = vshrl.u32 %v1367, 7
      %v1369 = vsub.s32 %v1366, %v1368
      %v1370 = vrot.slane %v1363, %v1369
      %v1372 = vmul.f32 %v1308, %v1370
      %s1373 = scalar_lea.vmem %s3, 1
      %v1374 = vld [vmem:[%s1373] ss:$8 sm:$0xf]
      %1375 = vrot.lane.b32.xlu0 %v1313, 22
      %v1376 = vpop.permute.xlu0 %1375
      %1377 = vrot.lane.b32.xlu0 %v1317, 22
      %v1378 = vpop.permute.xlu0 %1377
      %1379 = vrot.lane.b32.xlu0 %v1321, 22
      %v1380 = vpop.permute.xlu0 %1379
      %1381 = vrot.lane.b32.xlu0 %v1325, 22
      %v1382 = vpop.permute.xlu0 %1381
      %v1383 = vsel %vm582, %v1380, %v1382
      %v1384 = vsel %vm582, %v1378, %v1380
      %v1385 = vsel %vm582, %v1376, %v1378
      %v1386 = vsel %vm582, %v1382, %v1376
      %v1391 = vcombine.low %v1386, %v1385
      %v1392 = vcombine.low %v1384, %v1383
      %v1394 = vunpack.c.l.s4 1966171168
      %v1395 = vunpack.c.0.s8 %v1394
      %v1396 = vlaneseq
      %v1397 = vshrl.u32 %v1396, 7
      %v1398 = vsub.s32 %v1395, %v1397
      %v1399 = vrot.slane %v1391, %v1398
      %v1401 = vunpack.c.l.s4 1966171168
      %v1402 = vunpack.c.0.s8 %v1401
      %v1403 = vlaneseq
      %v1404 = vshrl.u32 %v1403, 7
      %v1405 = vsub.s32 %v1402, %v1404
      %v1406 = vrot.slane %v1392, %v1405
      %v1407 = vcombine.low %v1399, %v1406
      %v1409 = vunpack.c.l.s4 1966171168
      %v1410 = vunpack.c.0.s8 %v1409
      %v1411 = vlaneseq
      %v1412 = vshrl.u32 %v1411, 7
      %v1413 = vsub.s32 %v1410, %v1412
      %v1414 = vrot.slane %v1407, %v1413
      %v1416 = vmul.f32 %v1374, %v1414
      %v1417 = vadd.f32 %v1372, %v1416
      %s1418 = scalar_lea.vmem %s3, 2
      %v1419 = vld [vmem:[%s1418] ss:$8 sm:$0xf]
      %v1420 = vmul.f32 %v1419, %v1307
      %v1421 = vadd.f32 %v1417, %v1420
      %s1422 = scalar_lea.vmem %s3, 3
      %v1423 = vld [vmem:[%s1422] ss:$8 sm:$0xf]
      %1424 = vrot.lane.b32.xlu0 %v1313, 106
      %v1425 = vpop.permute.xlu0 %1424
      %1426 = vrot.lane.b32.xlu0 %v1317, 106
      %v1427 = vpop.permute.xlu0 %1426
      %1428 = vrot.lane.b32.xlu0 %v1321, 106
      %v1429 = vpop.permute.xlu0 %1428
      %1430 = vrot.lane.b32.xlu0 %v1325, 106
      %v1431 = vpop.permute.xlu0 %1430
      %v1432 = vsel %vm671, %v1429, %v1431
      %v1433 = vsel %vm671, %v1427, %v1429
      %v1434 = vsel %vm671, %v1425, %v1427
      %v1435 = vsel %vm671, %v1431, %v1425
      %v1440 = vcombine.low %v1434, %v1433
      %v1441 = vcombine.low %v1432, %v1435
      %v1443 = vunpack.c.l.s4 1966171168
      %v1444 = vunpack.c.0.s8 %v1443
      %v1445 = vlaneseq
      %v1446 = vshrl.u32 %v1445, 7
      %v1447 = vsub.s32 %v1444, %v1446
      %v1448 = vrot.slane %v1440, %v1447
      %v1450 = vunpack.c.l.s4 1966171168
      %v1451 = vunpack.c.0.s8 %v1450
      %v1452 = vlaneseq
      %v1453 = vshrl.u32 %v1452, 7
      %v1454 = vsub.s32 %v1451, %v1453
      %v1455 = vrot.slane %v1441, %v1454
      %v1456 = vcombine.low %v1448, %v1455
      %v1458 = vunpack.c.l.s4 1966171168
      %v1459 = vunpack.c.0.s8 %v1458
      %v1460 = vlaneseq
      %v1461 = vshrl.u32 %v1460, 7
      %v1462 = vsub.s32 %v1459, %v1461
      %v1463 = vrot.slane %v1456, %v1462
      %v1465 = vmul.f32 %v1423, %v1463
      %v1466 = vadd.f32 %v1421, %v1465
      %s1467 = scalar_lea.vmem %s3, 4
      %v1468 = vld [vmem:[%s1467] ss:$8 sm:$0xf]
      %1469 = vrot.lane.b32.xlu0 %v1313, 84
      %v1470 = vpop.permute.xlu0 %1469
      %1471 = vrot.lane.b32.xlu0 %v1317, 84
      %v1472 = vpop.permute.xlu0 %1471
      %1473 = vrot.lane.b32.xlu0 %v1321, 84
      %v1474 = vpop.permute.xlu0 %1473
      %1475 = vrot.lane.b32.xlu0 %v1325, 84
      %v1476 = vpop.permute.xlu0 %1475
      %vm1477 = vcmp.lt.s32.totalorder %v564, 84
      %v1478 = vsel %vm1477, %v1474, %v1476
      %v1479 = vsel %vm1477, %v1472, %v1474
      %v1480 = vsel %vm1477, %v1470, %v1472
      %v1481 = vsel %vm1477, %v1476, %v1470
      %v1486 = vcombine.low %v1480, %v1479
      %v1487 = vcombine.low %v1478, %v1481
      %v1489 = vunpack.c.l.s4 1966171168
      %v1490 = vunpack.c.0.s8 %v1489
      %v1491 = vlaneseq
      %v1492 = vshrl.u32 %v1491, 7
      %v1493 = vsub.s32 %v1490, %v1492
      %v1494 = vrot.slane %v1486, %v1493
      %v1496 = vunpack.c.l.s4 1966171168
      %v1497 = vunpack.c.0.s8 %v1496
      %v1498 = vlaneseq
      %v1499 = vshrl.u32 %v1498, 7
      %v1500 = vsub.s32 %v1497, %v1499
      %v1501 = vrot.slane %v1487, %v1500
      %v1502 = vcombine.low %v1494, %v1501
      %v1504 = vunpack.c.l.s4 1966171168
      %v1505 = vunpack.c.0.s8 %v1504
      %v1506 = vlaneseq
      %v1507 = vshrl.u32 %v1506, 7
      %v1508 = vsub.s32 %v1505, %v1507
      %v1509 = vrot.slane %v1502, %v1508
      %v1511 = vmul.f32 %v1468, %v1509
      %v1512 = vadd.f32 %v1466, %v1511
      %v1513 = vmul.f32 %v1512, 0.04
      %v1514 = vld [vmem:[#allocation3] sm:$0x1]
      %1516 = vset.pattern.permute.xlu0 0
      %1517 = vperm.xlu0 %1516, %v1514
      %v1518 = vpop.permute.xlu0 %1517
      %v1520 = vlaneseq
      %v1521 = vshrl.u32 %v1520, 7
      %v1522 = vsub.s32 0, %v1521
      %v1523 = vrot.slane %v1518, %v1522
      %v1524 = vadd.f32 %v1513, %v1523
      %1525 = vrot.lane.b32.xlu0 %v1053, 23
      %v1526 = vpop.permute.xlu0 %1525
      %1527 = vrot.lane.b32.xlu0 %v1054, 23
      %v1528 = vpop.permute.xlu0 %1527
      %1529 = vrot.lane.b32.xlu0 %v1055, 23
      %v1530 = vpop.permute.xlu0 %1529
      %1531 = vrot.lane.b32.xlu0 %v1056, 23
      %v1532 = vpop.permute.xlu0 %1531
      %v1533 = vsel %vm565, %v1530, %v1532
      %v1534 = vsel %vm565, %v1528, %v1530
      %v1535 = vsel %vm565, %v1526, %v1528
      %v1536 = vsel %vm565, %v1532, %v1526
      %1537 = vst [vmem:[#allocation2] sm:$0xf] %v1536
      %1538 = vst [vmem:[#allocation2 + $0x8] sm:$0xf] %v1535
      %1539 = vst [vmem:[#allocation2 + $0x10] sm:$0xf] %v1534
      %1540 = vst [vmem:[#allocation2 + $0x18] sm:$0xf] %v1533
      %1541 = vrot.lane.b32.xlu0 %v1053, 69
      %v1542 = vpop.permute.xlu0 %1541
      %1543 = vrot.lane.b32.xlu0 %v1054, 69
      %v1544 = vpop.permute.xlu0 %1543
      %1545 = vrot.lane.b32.xlu0 %v1055, 69
      %v1546 = vpop.permute.xlu0 %1545
      %1547 = vrot.lane.b32.xlu0 %v1056, 69
      %v1548 = vpop.permute.xlu0 %1547
      %vm1549 = vcmp.lt.s32.totalorder %v564, 69
      %v1550 = vsel %vm1549, %v1546, %v1548
      %v1551 = vsel %vm1549, %v1544, %v1546
      %v1552 = vsel %vm1549, %v1542, %v1544
      %v1553 = vsel %vm1549, %v1548, %v1542
      %v1558 = vrot.slane %v1553, 4
      %v1559 = vrot.slane %v1552, 4
      %v1560 = vrot.slane %v1551, 4
      %v1561 = vrot.slane %v1550, 4
      %1566 = vst [vmem:[#allocation2 + $0x80] sm:$0xf0] %v1558
      %1567 = vst [vmem:[#allocation2 + $0x88] sm:$0xf0] %v1559
      %1568 = vst [vmem:[#allocation2 + $0x90] sm:$0xf0] %v1560
      %1569 = vst [vmem:[#allocation2 + $0x98] sm:$0xf0] %v1561
      %1570 = vrot.lane.b32.xlu0 %v1053, 22
      %v1571 = vpop.permute.xlu0 %1570
      %1572 = vrot.lane.b32.xlu0 %v1054, 22
      %v1573 = vpop.permute.xlu0 %1572
      %1574 = vrot.lane.b32.xlu0 %v1055, 22
      %v1575 = vpop.permute.xlu0 %1574
      %1576 = vrot.lane.b32.xlu0 %v1056, 22
      %v1577 = vpop.permute.xlu0 %1576
      %v1578 = vsel %vm582, %v1575, %v1577
      %v1579 = vsel %vm582, %v1573, %v1575
      %v1580 = vsel %vm582, %v1571, %v1573
      %v1581 = vsel %vm582, %v1577, %v1571
      %v1586 = vrot.slane %v1581, 4
      %v1587 = vrot.slane %v1580, 4
      %v1588 = vrot.slane %v1579, 4
      %v1589 = vrot.slane %v1578, 4
      %1594 = vst [vmem:[#allocation2] sm:$0xf0] %v1586
      %1595 = vst [vmem:[#allocation2 + $0x8] sm:$0xf0] %v1587
      %1596 = vst [vmem:[#allocation2 + $0x10] sm:$0xf0] %v1588
      %1597 = vst [vmem:[#allocation2 + $0x18] sm:$0xf0] %v1589
      %1598 = vrot.lane.b32.xlu0 %v1053, 66
      %v1599 = vpop.permute.xlu0 %1598
      %1600 = vrot.lane.b32.xlu0 %v1054, 66
      %v1601 = vpop.permute.xlu0 %1600
      %1602 = vrot.lane.b32.xlu0 %v1055, 66
      %v1603 = vpop.permute.xlu0 %1602
      %1604 = vrot.lane.b32.xlu0 %v1056, 66
      %v1605 = vpop.permute.xlu0 %1604
      %vm1606 = vcmp.lt.s32.totalorder %v564, 66
      %v1607 = vsel %vm1606, %v1603, %v1605
      %v1608 = vsel %vm1606, %v1601, %v1603
      %v1609 = vsel %vm1606, %v1599, %v1601
      %v1610 = vsel %vm1606, %v1605, %v1599
      %1611 = vst [vmem:[#allocation2 + $0xa0] sm:$0xf] %v1610
      %1612 = vst [vmem:[#allocation2 + $0xa8] sm:$0xf] %v1609
      %1613 = vst [vmem:[#allocation2 + $0xb0] sm:$0xf] %v1608
      %1614 = vst [vmem:[#allocation2 + $0xb8] sm:$0xf] %v1607
      %1615 = vrot.lane.b32.xlu0 %v1053, 21
      %v1616 = vpop.permute.xlu0 %1615
      %1617 = vrot.lane.b32.xlu0 %v1054, 21
      %v1618 = vpop.permute.xlu0 %1617
      %1619 = vrot.lane.b32.xlu0 %v1055, 21
      %v1620 = vpop.permute.xlu0 %1619
      %1621 = vrot.lane.b32.xlu0 %v1056, 21
      %v1622 = vpop.permute.xlu0 %1621
      %v1623 = vsel %vm599, %v1620, %v1622
      %v1624 = vsel %vm599, %v1618, %v1620
      %v1625 = vsel %vm599, %v1616, %v1618
      %v1626 = vsel %vm599, %v1622, %v1616
      %1627 = vst [vmem:[#allocation2 + $0x20] sm:$0xf] %v1626
      %1628 = vst [vmem:[#allocation2 + $0x28] sm:$0xf] %v1625
      %1629 = vst [vmem:[#allocation2 + $0x30] sm:$0xf] %v1624
      %1630 = vst [vmem:[#allocation2 + $0x38] sm:$0xf] %v1623
      %1631 = vrot.lane.b32.xlu0 %v1053, 63
      %v1632 = vpop.permute.xlu0 %1631
      %1633 = vrot.lane.b32.xlu0 %v1054, 63
      %v1634 = vpop.permute.xlu0 %1633
      %1635 = vrot.lane.b32.xlu0 %v1055, 63
      %v1636 = vpop.permute.xlu0 %1635
      %1637 = vrot.lane.b32.xlu0 %v1056, 63
      %v1638 = vpop.permute.xlu0 %1637
      %vm1639 = vcmp.lt.s32.totalorder %v564, 63
      %v1640 = vsel %vm1639, %v1636, %v1638
      %v1641 = vsel %vm1639, %v1634, %v1636
      %v1642 = vsel %vm1639, %v1632, %v1634
      %v1643 = vsel %vm1639, %v1638, %v1632
      %v1648 = vrot.slane %v1643, 4
      %v1649 = vrot.slane %v1642, 4
      %v1650 = vrot.slane %v1641, 4
      %v1651 = vrot.slane %v1640, 4
      %1656 = vst [vmem:[#allocation2 + $0xa0] sm:$0xf0] %v1648
      %1657 = vst [vmem:[#allocation2 + $0xa8] sm:$0xf0] %v1649
      %1658 = vst [vmem:[#allocation2 + $0xb0] sm:$0xf0] %v1650
      %1659 = vst [vmem:[#allocation2 + $0xb8] sm:$0xf0] %v1651
      %1660 = vrot.lane.b32.xlu0 %v1053, 1
      %v1661 = vpop.permute.xlu0 %1660
      %1662 = vrot.lane.b32.xlu0 %v1054, 1
      %v1663 = vpop.permute.xlu0 %1662
      %1664 = vrot.lane.b32.xlu0 %v1055, 1
      %v1665 = vpop.permute.xlu0 %1664
      %1666 = vrot.lane.b32.xlu0 %v1056, 1
      %v1667 = vpop.permute.xlu0 %1666
      %v1668 = vsel %vm616, %v1665, %v1667
      %v1669 = vsel %vm616, %v1663, %v1665
      %v1670 = vsel %vm616, %v1661, %v1663
      %v1671 = vsel %vm616, %v1667, %v1661
      %v1676 = vrot.slane %v1671, 4
      %v1677 = vrot.slane %v1670, 4
      %v1678 = vrot.slane %v1669, 4
      %v1679 = vrot.slane %v1668, 4
      %1684 = vst [vmem:[#allocation2 + $0x20] sm:$0xf0] %v1676
      %1685 = vst [vmem:[#allocation2 + $0x28] sm:$0xf0] %v1677
      %1686 = vst [vmem:[#allocation2 + $0x30] sm:$0xf0] %v1678
      %1687 = vst [vmem:[#allocation2 + $0x38] sm:$0xf0] %v1679
      %1688 = vrot.lane.b32.xlu0 %v1053, 3
      %v1689 = vpop.permute.xlu0 %1688
      %1690 = vrot.lane.b32.xlu0 %v1054, 3
      %v1691 = vpop.permute.xlu0 %1690
      %1692 = vrot.lane.b32.xlu0 %v1055, 3
      %v1693 = vpop.permute.xlu0 %1692
      %1694 = vrot.lane.b32.xlu0 %v1056, 3
      %v1695 = vpop.permute.xlu0 %1694
      %vm1696 = vcmp.lt.s32.totalorder %v564, 3
      %v1697 = vsel %vm1696, %v1693, %v1695
      %v1698 = vsel %vm1696, %v1691, %v1693
      %v1699 = vsel %vm1696, %v1689, %v1691
      %v1700 = vsel %vm1696, %v1695, %v1689
      %1701 = vst [vmem:[#allocation2 + $0xc0] sm:$0xf] %v1700
      %1702 = vst [vmem:[#allocation2 + $0xc8] sm:$0xf] %v1699
      %1703 = vst [vmem:[#allocation2 + $0xd0] sm:$0xf] %v1698
      %1704 = vst [vmem:[#allocation2 + $0xd8] sm:$0xf] %v1697
      %1705 = vst [vmem:[#allocation2 + $0x40] sm:$0xf] %v1053
      %1706 = vst [vmem:[#allocation2 + $0x48] sm:$0xf] %v1054
      %1707 = vst [vmem:[#allocation2 + $0x50] sm:$0xf] %v1055
      %1708 = vst [vmem:[#allocation2 + $0x58] sm:$0xf] %v1056
      %v1713 = vrot.slane %v1053, 4
      %v1714 = vrot.slane %v1054, 4
      %v1715 = vrot.slane %v1055, 4
      %v1716 = vrot.slane %v1056, 4
      %1721 = vst [vmem:[#allocation2 + $0xc0] sm:$0xf0] %v1713
      %1722 = vst [vmem:[#allocation2 + $0xc8] sm:$0xf0] %v1714
      %1723 = vst [vmem:[#allocation2 + $0xd0] sm:$0xf0] %v1715
      %1724 = vst [vmem:[#allocation2 + $0xd8] sm:$0xf0] %v1716
      %1725 = vrot.lane.b32.xlu0 %v1053, 127
      %v1726 = vpop.permute.xlu0 %1725
      %1727 = vrot.lane.b32.xlu0 %v1054, 127
      %v1728 = vpop.permute.xlu0 %1727
      %1729 = vrot.lane.b32.xlu0 %v1055, 127
      %v1730 = vpop.permute.xlu0 %1729
      %1731 = vrot.lane.b32.xlu0 %v1056, 127
      %v1732 = vpop.permute.xlu0 %1731
      %v1733 = vsel %vm637, %v1730, %v1732
      %v1734 = vsel %vm637, %v1728, %v1730
      %v1735 = vsel %vm637, %v1726, %v1728
      %v1736 = vsel %vm637, %v1732, %v1726
      %v1741 = vrot.slane %v1735, 4
      %v1742 = vrot.slane %v1734, 4
      %v1743 = vrot.slane %v1733, 4
      %v1744 = vrot.slane %v1736, 4
      %1749 = vst [vmem:[#allocation2 + $0x40] sm:$0xf0] %v1741
      %1750 = vst [vmem:[#allocation2 + $0x48] sm:$0xf0] %v1742
      %1751 = vst [vmem:[#allocation2 + $0x50] sm:$0xf0] %v1743
      %1752 = vst [vmem:[#allocation2 + $0x58] sm:$0xf0] %v1744
      %1753 = vrot.lane.b32.xlu0 %v1053, 125
      %v1754 = vpop.permute.xlu0 %1753
      %1755 = vrot.lane.b32.xlu0 %v1054, 125
      %v1756 = vpop.permute.xlu0 %1755
      %1757 = vrot.lane.b32.xlu0 %v1055, 125
      %v1758 = vpop.permute.xlu0 %1757
      %1759 = vrot.lane.b32.xlu0 %v1056, 125
      %v1760 = vpop.permute.xlu0 %1759
      %vm1761 = vcmp.lt.s32.totalorder %v564, 125
      %v1762 = vsel %vm1761, %v1758, %v1760
      %v1763 = vsel %vm1761, %v1756, %v1758
      %v1764 = vsel %vm1761, %v1754, %v1756
      %v1765 = vsel %vm1761, %v1760, %v1754
      %1766 = vst [vmem:[#allocation2 + $0xe0] sm:$0xf] %v1764
      %1767 = vst [vmem:[#allocation2 + $0xe8] sm:$0xf] %v1763
      %1768 = vst [vmem:[#allocation2 + $0xf0] sm:$0xf] %v1762
      %1769 = vst [vmem:[#allocation2 + $0xf8] sm:$0xf] %v1765
      %1770 = vrot.lane.b32.xlu0 %v1053, 107
      %v1771 = vpop.permute.xlu0 %1770
      %1772 = vrot.lane.b32.xlu0 %v1054, 107
      %v1773 = vpop.permute.xlu0 %1772
      %1774 = vrot.lane.b32.xlu0 %v1055, 107
      %v1775 = vpop.permute.xlu0 %1774
      %1776 = vrot.lane.b32.xlu0 %v1056, 107
      %v1777 = vpop.permute.xlu0 %1776
      %v1778 = vsel %vm654, %v1775, %v1777
      %v1779 = vsel %vm654, %v1773, %v1775
      %v1780 = vsel %vm654, %v1771, %v1773
      %v1781 = vsel %vm654, %v1777, %v1771
      %1782 = vst [vmem:[#allocation2 + $0x60] sm:$0xf] %v1780
      %1783 = vst [vmem:[#allocation2 + $0x68] sm:$0xf] %v1779
      %1784 = vst [vmem:[#allocation2 + $0x70] sm:$0xf] %v1778
      %1785 = vst [vmem:[#allocation2 + $0x78] sm:$0xf] %v1781
      %1786 = vrot.lane.b32.xlu0 %v1053, 65
      %v1787 = vpop.permute.xlu0 %1786
      %1788 = vrot.lane.b32.xlu0 %v1054, 65
      %v1789 = vpop.permute.xlu0 %1788
      %1790 = vrot.lane.b32.xlu0 %v1055, 65
      %v1791 = vpop.permute.xlu0 %1790
      %1792 = vrot.lane.b32.xlu0 %v1056, 65
      %v1793 = vpop.permute.xlu0 %1792
      %vm1794 = vcmp.lt.s32.totalorder %v564, 65
      %v1795 = vsel %vm1794, %v1791, %v1793
      %v1796 = vsel %vm1794, %v1789, %v1791
      %v1797 = vsel %vm1794, %v1787, %v1789
      %v1798 = vsel %vm1794, %v1793, %v1787
      %v1803 = vrot.slane %v1797, 4
      %v1804 = vrot.slane %v1796, 4
      %v1805 = vrot.slane %v1795, 4
      %v1806 = vrot.slane %v1798, 4
      %1811 = vst [vmem:[#allocation2 + $0xe0] sm:$0xf0] %v1803
      %1812 = vst [vmem:[#allocation2 + $0xe8] sm:$0xf0] %v1804
      %1813 = vst [vmem:[#allocation2 + $0xf0] sm:$0xf0] %v1805
      %1814 = vst [vmem:[#allocation2 + $0xf8] sm:$0xf0] %v1806
      %1815 = vrot.lane.b32.xlu0 %v1053, 106
      %v1816 = vpop.permute.xlu0 %1815
      %1817 = vrot.lane.b32.xlu0 %v1054, 106
      %v1818 = vpop.permute.xlu0 %1817
      %1819 = vrot.lane.b32.xlu0 %v1055, 106
      %v1820 = vpop.permute.xlu0 %1819
      %1821 = vrot.lane.b32.xlu0 %v1056, 106
      %v1822 = vpop.permute.xlu0 %1821
      %v1823 = vsel %vm671, %v1820, %v1822
      %v1824 = vsel %vm671, %v1818, %v1820
      %v1825 = vsel %vm671, %v1816, %v1818
      %v1826 = vsel %vm671, %v1822, %v1816
      %v1831 = vrot.slane %v1825, 4
      %v1832 = vrot.slane %v1824, 4
      %v1833 = vrot.slane %v1823, 4
      %v1834 = vrot.slane %v1826, 4
      %1839 = vst [vmem:[#allocation2 + $0x60] sm:$0xf0] %v1831
      %1840 = vst [vmem:[#allocation2 + $0x68] sm:$0xf0] %v1832
      %1841 = vst [vmem:[#allocation2 + $0x70] sm:$0xf0] %v1833
      %1842 = vst [vmem:[#allocation2 + $0x78] sm:$0xf0] %v1834
      %1843 = vrot.lane.b32.xlu0 %v1053, 62
      %v1844 = vpop.permute.xlu0 %1843
      %1845 = vrot.lane.b32.xlu0 %v1054, 62
      %v1846 = vpop.permute.xlu0 %1845
      %1847 = vrot.lane.b32.xlu0 %v1055, 62
      %v1848 = vpop.permute.xlu0 %1847
      %1849 = vrot.lane.b32.xlu0 %v1056, 62
      %v1850 = vpop.permute.xlu0 %1849
      %vm1851 = vcmp.lt.s32.totalorder %v564, 62
      %v1852 = vsel %vm1851, %v1848, %v1850
      %v1853 = vsel %vm1851, %v1846, %v1848
      %v1854 = vsel %vm1851, %v1844, %v1846
      %v1855 = vsel %vm1851, %v1850, %v1844
      %1856 = vst [vmem:[#allocation2 + $0x100] sm:$0xf] %v1854
      %1857 = vst [vmem:[#allocation2 + $0x108] sm:$0xf] %v1853
      %1858 = vst [vmem:[#allocation2 + $0x110] sm:$0xf] %v1852
      %1859 = vst [vmem:[#allocation2 + $0x118] sm:$0xf] %v1855
      %1860 = vrot.lane.b32.xlu0 %v1053, 105
      %v1861 = vpop.permute.xlu0 %1860
      %1862 = vrot.lane.b32.xlu0 %v1054, 105
      %v1863 = vpop.permute.xlu0 %1862
      %1864 = vrot.lane.b32.xlu0 %v1055, 105
      %v1865 = vpop.permute.xlu0 %1864
      %1866 = vrot.lane.b32.xlu0 %v1056, 105
      %v1867 = vpop.permute.xlu0 %1866
      %v1868 = vsel %vm688, %v1865, %v1867
      %v1869 = vsel %vm688, %v1863, %v1865
      %v1870 = vsel %vm688, %v1861, %v1863
      %v1871 = vsel %vm688, %v1867, %v1861
      %1872 = vst [vmem:[#allocation2 + $0x80] sm:$0xf] %v1870
      %1873 = vst [vmem:[#allocation2 + $0x88] sm:$0xf] %v1869
      %1874 = vst [vmem:[#allocation2 + $0x90] sm:$0xf] %v1868
      %1875 = vst [vmem:[#allocation2 + $0x98] sm:$0xf] %v1871
      %1876 = vrot.lane.b32.xlu0 %v1053, 59
      %v1877 = vpop.permute.xlu0 %1876
      %1878 = vrot.lane.b32.xlu0 %v1054, 59
      %v1879 = vpop.permute.xlu0 %1878
      %1880 = vrot.lane.b32.xlu0 %v1055, 59
      %v1881 = vpop.permute.xlu0 %1880
      %1882 = vrot.lane.b32.xlu0 %v1056, 59
      %v1883 = vpop.permute.xlu0 %1882
      %vm1884 = vcmp.lt.s32.totalorder %v564, 59
      %v1885 = vsel %vm1884, %v1881, %v1883
      %v1886 = vsel %vm1884, %v1879, %v1881
      %v1887 = vsel %vm1884, %v1877, %v1879
      %v1888 = vsel %vm1884, %v1883, %v1877
      %v1893 = vrot.slane %v1887, 4
      %v1894 = vrot.slane %v1886, 4
      %v1895 = vrot.slane %v1885, 4
      %v1896 = vrot.slane %v1888, 4
      %1901 = vst [vmem:[#allocation2 + $0x100] sm:$0xf0] %v1893
      %1902 = vst [vmem:[#allocation2 + $0x108] sm:$0xf0] %v1894
      %1903 = vst [vmem:[#allocation2 + $0x110] sm:$0xf0] %v1895
      %1904 = vst [vmem:[#allocation2 + $0x118] sm:$0xf0] %v1896
      %v1905 = vld [vmem:[%s11] sm:$0xff]
      %v1906 = vld [vmem:[#allocation2] sm:$0xff]
      %v1907 = vld [vmem:[#allocation2 + $0x8] sm:$0xff]
      %v1908 = vld [vmem:[#allocation2 + $0x10] sm:$0xff]
      %v1909 = vld [vmem:[#allocation2 + $0x18] sm:$0xff]
      %v1910 = vld [vmem:[#allocation2 + $0x20] sm:$0xff]
      %v1911 = vld [vmem:[#allocation2 + $0x28] sm:$0xff]
      %v1912 = vld [vmem:[#allocation2 + $0x30] sm:$0xff]
      %v1913 = vld [vmem:[#allocation2 + $0x38] sm:$0xff]
      %v1914 = vld [vmem:[#allocation2 + $0x40] sm:$0xff]
      %v1915 = vld [vmem:[#allocation2 + $0x48] sm:$0xff]
      %v1916 = vld [vmem:[#allocation2 + $0x50] sm:$0xff]
      %v1917 = vld [vmem:[#allocation2 + $0x58] sm:$0xff]
      %v1918 = vld [vmem:[#allocation2 + $0x60] sm:$0xff]
      %v1919 = vld [vmem:[#allocation2 + $0x68] sm:$0xff]
      %v1920 = vld [vmem:[#allocation2 + $0x70] sm:$0xff]
      %v1921 = vld [vmem:[#allocation2 + $0x78] sm:$0xff]
      %v1922 = vld [vmem:[#allocation2 + $0x80] sm:$0xf]
      %v1923 = vld [vmem:[#allocation2 + $0x88] sm:$0xf]
      %v1924 = vld [vmem:[#allocation2 + $0x90] sm:$0xf]
      %v1925 = vld [vmem:[#allocation2 + $0x98] sm:$0xf]
      %vm1926 = vcmask 293888
      %v1928 = vsel %vm1926, %v1905, 0
      %v1931 = vsel %vm954, %v1922, 0
      %v1934 = vsel %vm954, %v1923, 0
      %v1937 = vsel %vm954, %v1924, 0
      %v1940 = vsel %vm954, %v1925, 0
      %1942 = vmatprep.subr.mxu0 0.0
      %1943 = vmatpush1.msra.mxu0 0.0
      %1944 = vmatprep.subr.mxu0 0.0
      %1945 = vmatpush1.msra.mxu0 0.0
      %1946 = vmatprep.subr.mxu0 0.0
      %1947 = vmatpush1.msra.mxu0 0.0
      %1948 = vmatprep.subr.mxu0 0.0
      %1949 = vmatpush1.msra.mxu0 0.0
      %1950 = vmatprep.subr.mxu0 0.0
      %1951 = vmatpush1.msra.mxu0 0.0
      %1952 = vmatprep.subr.mxu0 0.0
      %1953 = vmatpush1.msra.mxu0 0.0
      %1954 = vmatprep.subr.mxu0 0.0
      %1955 = vmatpush1.msra.mxu0 0.0
      %1956 = vmatprep.subr.mxu0 0.0
      %1957 = vmatpush1.msra.mxu0 0.0
      %1958 = vmatprep.subr.mxu0 0.0
      %1959 = vmatpush1.msra.mxu0 0.0
      %1960 = vmatprep.subr.mxu0 0.0
      %1961 = vmatpush1.msra.mxu0 0.0
      %1962 = vmatprep.subr.mxu0 0.0
      %1963 = vmatpush1.msra.mxu0 0.0
      %1964 = vmatprep.subr.mxu0 %v1934
      %1965 = vmatpush1.msra.mxu0 %v1931
      %1966 = vmatprep.subr.mxu0 %v1919
      %1967 = vmatpush1.msra.mxu0 %v1918
      %1968 = vmatprep.subr.mxu0 %v1915
      %1969 = vmatpush1.msra.mxu0 %v1914
      %1970 = vmatprep.subr.mxu0 %v1911
      %1971 = vmatpush1.msra.mxu0 %v1910
      %1972 = vmatprep.subr.mxu0 %v1907
      %1973 = vmatpush1.msra.mxu0 %v1906
      %1974 = vmatprep.subr.mxu0 0.0
      %1975 = vmatpush2.msra.mxu0 0.0
      %1976 = vmatprep.subr.mxu0 0.0
      %1977 = vmatpush2.msra.mxu0 0.0
      %1978 = vmatprep.subr.mxu0 0.0
      %1979 = vmatpush2.msra.mxu0 0.0
      %1980 = vmatprep.subr.mxu0 0.0
      %1981 = vmatpush2.msra.mxu0 0.0
      %1982 = vmatprep.subr.mxu0 0.0
      %1983 = vmatpush2.msra.mxu0 0.0
      %1984 = vmatprep.subr.mxu0 0.0
      %1985 = vmatpush2.msra.mxu0 0.0
      %1986 = vmatprep.subr.mxu0 0.0
      %1987 = vmatpush2.msra.mxu0 0.0
      %1988 = vmatprep.subr.mxu0 0.0
      %1989 = vmatpush2.msra.mxu0 0.0
      %1990 = vmatprep.subr.mxu0 0.0
      %1991 = vmatpush2.msra.mxu0 0.0
      %1992 = vmatprep.subr.mxu0 0.0
      %1993 = vmatpush2.msra.mxu0 0.0
      %1994 = vmatprep.subr.mxu0 0.0
      %1995 = vmatpush2.msra.mxu0 0.0
      %1996 = vmatprep.subr.mxu0 0.0
      %1997 = vmatpush2.msra.mxu0 0.0
      %1998 = vmatprep.subr.mxu0 0.0
      %1999 = vmatpush2.msra.mxu0 0.0
      %2000 = vmatprep.subr.mxu0 0.0
      %2001 = vmatpush2.msra.mxu0 0.0
      %2002 = vmatprep.subr.mxu0 0.0
      %2003 = vmatpush2.msra.mxu0 0.0
      %2004 = vmatprep.subr.mxu0 0.0
      %2005 = vmatpush2.msra.mxu0 0.0
      %2006 = vmatprep.mubr.f32.mxu0 0.0
      %2007 = vmatmul.mubr.f32.gmra.mxu0 %v1928
      %v2008 = vpop.f32.mrf.mxu0
      %v2009 = vadd.f32 0.0, %v2008
      %v2010 = vpop.f32.mrf.mxu0
      %v2011 = vadd.f32 0.0, %v2010
      %2012 = vdwg.mxu0
      %2013 = vmatprep.subr.mxu0 0.0
      %2014 = vmatpush1.msra.mxu0 0.0
      %2015 = vmatprep.subr.mxu0 0.0
      %2016 = vmatpush1.msra.mxu0 0.0
      %2017 = vmatprep.subr.mxu0 0.0
      %2018 = vmatpush1.msra.mxu0 0.0
      %2019 = vmatprep.subr.mxu0 0.0
      %2020 = vmatpush1.msra.mxu0 0.0
      %2021 = vmatprep.subr.mxu0 0.0
      %2022 = vmatpush1.msra.mxu0 0.0
      %2023 = vmatprep.subr.mxu0 0.0
      %2024 = vmatpush1.msra.mxu0 0.0
      %2025 = vmatprep.subr.mxu0 0.0
      %2026 = vmatpush1.msra.mxu0 0.0
      %2027 = vmatprep.subr.mxu0 0.0
      %2028 = vmatpush1.msra.mxu0 0.0
      %2029 = vmatprep.subr.mxu0 0.0
      %2030 = vmatpush1.msra.mxu0 0.0
      %2031 = vmatprep.subr.mxu0 0.0
      %2032 = vmatpush1.msra.mxu0 0.0
      %2033 = vmatprep.subr.mxu0 0.0
      %2034 = vmatpush1.msra.mxu0 0.0
      %2035 = vmatprep.subr.mxu0 %v1940
      %2036 = vmatpush1.msra.mxu0 %v1937
      %2037 = vmatprep.subr.mxu0 %v1921
      %2038 = vmatpush1.msra.mxu0 %v1920
      %2039 = vmatprep.subr.mxu0 %v1917
      %2040 = vmatpush1.msra.mxu0 %v1916
      %2041 = vmatprep.subr.mxu0 %v1913
      %2042 = vmatpush1.msra.mxu0 %v1912
      %2043 = vmatprep.subr.mxu0 %v1909
      %2044 = vmatpush1.msra.mxu0 %v1908
      %2045 = vmatprep.subr.mxu0 0.0
      %2046 = vmatpush2.msra.mxu0 0.0
      %2047 = vmatprep.subr.mxu0 0.0
      %2048 = vmatpush2.msra.mxu0 0.0
      %2049 = vmatprep.subr.mxu0 0.0
      %2050 = vmatpush2.msra.mxu0 0.0
      %2051 = vmatprep.subr.mxu0 0.0
      %2052 = vmatpush2.msra.mxu0 0.0
      %2053 = vmatprep.subr.mxu0 0.0
      %2054 = vmatpush2.msra.mxu0 0.0
      %2055 = vmatprep.subr.mxu0 0.0
      %2056 = vmatpush2.msra.mxu0 0.0
      %2057 = vmatprep.subr.mxu0 0.0
      %2058 = vmatpush2.msra.mxu0 0.0
      %2059 = vmatprep.subr.mxu0 0.0
      %2060 = vmatpush2.msra.mxu0 0.0
      %2061 = vmatprep.subr.mxu0 0.0
      %2062 = vmatpush2.msra.mxu0 0.0
      %2063 = vmatprep.subr.mxu0 0.0
      %2064 = vmatpush2.msra.mxu0 0.0
      %2065 = vmatprep.subr.mxu0 0.0
      %2066 = vmatpush2.msra.mxu0 0.0
      %2067 = vmatprep.subr.mxu0 0.0
      %2068 = vmatpush2.msra.mxu0 0.0
      %2069 = vmatprep.subr.mxu0 0.0
      %2070 = vmatpush2.msra.mxu0 0.0
      %2071 = vmatprep.subr.mxu0 0.0
      %2072 = vmatpush2.msra.mxu0 0.0
      %2073 = vmatprep.subr.mxu0 0.0
      %2074 = vmatpush2.msra.mxu0 0.0
      %2075 = vmatprep.subr.mxu0 0.0
      %2076 = vmatpush2.msra.mxu0 0.0
      %2077 = vmatprep.mubr.f32.mxu0 0.0
      %2078 = vmatmul.mubr.f32.gmra.mxu0 %v1928
      %v2079 = vpop.f32.mrf.mxu0
      %v2080 = vadd.f32 0.0, %v2079
      %v2081 = vpop.f32.mrf.mxu0
      %v2082 = vadd.f32 0.0, %v2081
      %2083 = vdwg.mxu0
      %v2084 = vld [vmem:[%s12] sm:$0xff]
      %v2085 = vld [vmem:[#allocation2 + $0x80] sm:$0xf0]
      %v2086 = vld [vmem:[#allocation2 + $0x88] sm:$0xf0]
      %v2087 = vld [vmem:[#allocation2 + $0x90] sm:$0xf0]
      %v2088 = vld [vmem:[#allocation2 + $0x98] sm:$0xf0]
      %v2089 = vld [vmem:[#allocation2 + $0xa0] sm:$0xff]
      %v2090 = vld [vmem:[#allocation2 + $0xa8] sm:$0xff]
      %v2091 = vld [vmem:[#allocation2 + $0xb0] sm:$0xff]
      %v2092 = vld [vmem:[#allocation2 + $0xb8] sm:$0xff]
      %v2093 = vld [vmem:[#allocation2 + $0xc0] sm:$0xff]
      %v2094 = vld [vmem:[#allocation2 + $0xc8] sm:$0xff]
      %v2095 = vld [vmem:[#allocation2 + $0xd0] sm:$0xff]
      %v2096 = vld [vmem:[#allocation2 + $0xd8] sm:$0xff]
      %v2097 = vld [vmem:[#allocation2 + $0xe0] sm:$0xff]
      %v2098 = vld [vmem:[#allocation2 + $0xe8] sm:$0xff]
      %v2099 = vld [vmem:[#allocation2 + $0xf0] sm:$0xff]
      %v2100 = vld [vmem:[#allocation2 + $0xf8] sm:$0xff]
      %v2101 = vld [vmem:[#allocation2 + $0x100] sm:$0xff]
      %v2102 = vld [vmem:[#allocation2 + $0x108] sm:$0xff]
      %v2103 = vld [vmem:[#allocation2 + $0x110] sm:$0xff]
      %v2104 = vld [vmem:[#allocation2 + $0x118] sm:$0xff]
      %v2125 = vrot.slane %v2085, 4
      %v2126 = vrot.slane %v2089, 4
      %v2127 = vsel %vm954, %v2125, %v2126
      %v2128 = vrot.slane %v2086, 4
      %v2129 = vrot.slane %v2090, 4
      %v2130 = vsel %vm954, %v2128, %v2129
      %v2131 = vrot.slane %v2087, 4
      %v2132 = vrot.slane %v2091, 4
      %v2133 = vsel %vm954, %v2131, %v2132
      %v2134 = vrot.slane %v2088, 4
      %v2135 = vrot.slane %v2092, 4
      %v2136 = vsel %vm954, %v2134, %v2135
      %v2137 = vrot.slane %v2093, 4
      %v2138 = vsel %vm954, %v2126, %v2137
      %v2139 = vrot.slane %v2094, 4
      %v2140 = vsel %vm954, %v2129, %v2139
      %v2141 = vrot.slane %v2095, 4
      %v2142 = vsel %vm954, %v2132, %v2141
      %v2143 = vrot.slane %v2096, 4
      %v2144 = vsel %vm954, %v2135, %v2143
      %v2145 = vrot.slane %v2097, 4
      %v2146 = vsel %vm954, %v2137, %v2145
      %v2147 = vrot.slane %v2098, 4
      %v2148 = vsel %vm954, %v2139, %v2147
      %v2149 = vrot.slane %v2099, 4
      %v2150 = vsel %vm954, %v2141, %v2149
      %v2151 = vrot.slane %v2100, 4
      %v2152 = vsel %vm954, %v2143, %v2151
      %v2153 = vrot.slane %v2101, 4
      %v2154 = vsel %vm954, %v2145, %v2153
      %v2155 = vrot.slane %v2102, 4
      %v2156 = vsel %vm954, %v2147, %v2155
      %v2157 = vrot.slane %v2103, 4
      %v2158 = vsel %vm954, %v2149, %v2157
      %v2159 = vrot.slane %v2104, 4
      %v2160 = vsel %vm954, %v2151, %v2159
      %v2178 = vsel %vm1926, %v2084, 0
      %v2180 = vsel %vm954, %v2153, 0
      %v2182 = vsel %vm954, %v2155, 0
      %v2184 = vsel %vm954, %v2157, 0
      %v2186 = vsel %vm954, %v2159, 0
      %2188 = vmatprep.subr.mxu0 0.0
      %2189 = vmatpush1.msra.mxu0 0.0
      %2190 = vmatprep.subr.mxu0 0.0
      %2191 = vmatpush1.msra.mxu0 0.0
      %2192 = vmatprep.subr.mxu0 0.0
      %2193 = vmatpush1.msra.mxu0 0.0
      %2194 = vmatprep.subr.mxu0 0.0
      %2195 = vmatpush1.msra.mxu0 0.0
      %2196 = vmatprep.subr.mxu0 0.0
      %2197 = vmatpush1.msra.mxu0 0.0
      %2198 = vmatprep.subr.mxu0 0.0
      %2199 = vmatpush1.msra.mxu0 0.0
      %2200 = vmatprep.subr.mxu0 0.0
      %2201 = vmatpush1.msra.mxu0 0.0
      %2202 = vmatprep.subr.mxu0 0.0
      %2203 = vmatpush1.msra.mxu0 0.0
      %2204 = vmatprep.subr.mxu0 0.0
      %2205 = vmatpush1.msra.mxu0 0.0
      %2206 = vmatprep.subr.mxu0 0.0
      %2207 = vmatpush1.msra.mxu0 0.0
      %2208 = vmatprep.subr.mxu0 0.0
      %2209 = vmatpush1.msra.mxu0 0.0
      %2210 = vmatprep.subr.mxu0 %v2182
      %2211 = vmatpush1.msra.mxu0 %v2180
      %2212 = vmatprep.subr.mxu0 %v2156
      %2213 = vmatpush1.msra.mxu0 %v2154
      %2214 = vmatprep.subr.mxu0 %v2148
      %2215 = vmatpush1.msra.mxu0 %v2146
      %2216 = vmatprep.subr.mxu0 %v2140
      %2217 = vmatpush1.msra.mxu0 %v2138
      %2218 = vmatprep.subr.mxu0 %v2130
      %2219 = vmatpush1.msra.mxu0 %v2127
      %2220 = vmatprep.subr.mxu0 0.0
      %2221 = vmatpush2.msra.mxu0 0.0
      %2222 = vmatprep.subr.mxu0 0.0
      %2223 = vmatpush2.msra.mxu0 0.0
      %2224 = vmatprep.subr.mxu0 0.0
      %2225 = vmatpush2.msra.mxu0 0.0
      %2226 = vmatprep.subr.mxu0 0.0
      %2227 = vmatpush2.msra.mxu0 0.0
      %2228 = vmatprep.subr.mxu0 0.0
      %2229 = vmatpush2.msra.mxu0 0.0
      %2230 = vmatprep.subr.mxu0 0.0
      %2231 = vmatpush2.msra.mxu0 0.0
      %2232 = vmatprep.subr.mxu0 0.0
      %2233 = vmatpush2.msra.mxu0 0.0
      %2234 = vmatprep.subr.mxu0 0.0
      %2235 = vmatpush2.msra.mxu0 0.0
      %2236 = vmatprep.subr.mxu0 0.0
      %2237 = vmatpush2.msra.mxu0 0.0
      %2238 = vmatprep.subr.mxu0 0.0
      %2239 = vmatpush2.msra.mxu0 0.0
      %2240 = vmatprep.subr.mxu0 0.0
      %2241 = vmatpush2.msra.mxu0 0.0
      %2242 = vmatprep.subr.mxu0 0.0
      %2243 = vmatpush2.msra.mxu0 0.0
      %2244 = vmatprep.subr.mxu0 0.0
      %2245 = vmatpush2.msra.mxu0 0.0
      %2246 = vmatprep.subr.mxu0 0.0
      %2247 = vmatpush2.msra.mxu0 0.0
      %2248 = vmatprep.subr.mxu0 0.0
      %2249 = vmatpush2.msra.mxu0 0.0
      %2250 = vmatprep.subr.mxu0 0.0
      %2251 = vmatpush2.msra.mxu0 0.0
      %2252 = vmatprep.mubr.f32.mxu0 0.0
      %2253 = vmatmul.mubr.f32.gmra.mxu0 %v2178
      %v2254 = vpop.f32.mrf.mxu0
      %v2255 = vadd.f32 0.0, %v2254
      %v2256 = vpop.f32.mrf.mxu0
      %v2257 = vadd.f32 0.0, %v2256
      %2258 = vdwg.mxu0
      %2259 = vmatprep.subr.mxu0 0.0
      %2260 = vmatpush1.msra.mxu0 0.0
      %2261 = vmatprep.subr.mxu0 0.0
      %2262 = vmatpush1.msra.mxu0 0.0
      %2263 = vmatprep.subr.mxu0 0.0
      %2264 = vmatpush1.msra.mxu0 0.0
      %2265 = vmatprep.subr.mxu0 0.0
      %2266 = vmatpush1.msra.mxu0 0.0
      %2267 = vmatprep.subr.mxu0 0.0
      %2268 = vmatpush1.msra.mxu0 0.0
      %2269 = vmatprep.subr.mxu0 0.0
      %2270 = vmatpush1.msra.mxu0 0.0
      %2271 = vmatprep.subr.mxu0 0.0
      %2272 = vmatpush1.msra.mxu0 0.0
      %2273 = vmatprep.subr.mxu0 0.0
      %2274 = vmatpush1.msra.mxu0 0.0
      %2275 = vmatprep.subr.mxu0 0.0
      %2276 = vmatpush1.msra.mxu0 0.0
      %2277 = vmatprep.subr.mxu0 0.0
      %2278 = vmatpush1.msra.mxu0 0.0
      %2279 = vmatprep.subr.mxu0 0.0
      %2280 = vmatpush1.msra.mxu0 0.0
      %2281 = vmatprep.subr.mxu0 %v2186
      %2282 = vmatpush1.msra.mxu0 %v2184
      %2283 = vmatprep.subr.mxu0 %v2160
      %2284 = vmatpush1.msra.mxu0 %v2158
      %2285 = vmatprep.subr.mxu0 %v2152
      %2286 = vmatpush1.msra.mxu0 %v2150
      %2287 = vmatprep.subr.mxu0 %v2144
      %2288 = vmatpush1.msra.mxu0 %v2142
      %2289 = vmatprep.subr.mxu0 %v2136
      %2290 = vmatpush1.msra.mxu0 %v2133
      %2291 = vmatprep.subr.mxu0 0.0
      %2292 = vmatpush2.msra.mxu0 0.0
      %2293 = vmatprep.subr.mxu0 0.0
      %2294 = vmatpush2.msra.mxu0 0.0
      %2295 = vmatprep.subr.mxu0 0.0
      %2296 = vmatpush2.msra.mxu0 0.0
      %2297 = vmatprep.subr.mxu0 0.0
      %2298 = vmatpush2.msra.mxu0 0.0
      %2299 = vmatprep.subr.mxu0 0.0
      %2300 = vmatpush2.msra.mxu0 0.0
      %2301 = vmatprep.subr.mxu0 0.0
      %2302 = vmatpush2.msra.mxu0 0.0
      %2303 = vmatprep.subr.mxu0 0.0
      %2304 = vmatpush2.msra.mxu0 0.0
      %2305 = vmatprep.subr.mxu0 0.0
      %2306 = vmatpush2.msra.mxu0 0.0
      %2307 = vmatprep.subr.mxu0 0.0
      %2308 = vmatpush2.msra.mxu0 0.0
      %2309 = vmatprep.subr.mxu0 0.0
      %2310 = vmatpush2.msra.mxu0 0.0
      %2311 = vmatprep.subr.mxu0 0.0
      %2312 = vmatpush2.msra.mxu0 0.0
      %2313 = vmatprep.subr.mxu0 0.0
      %2314 = vmatpush2.msra.mxu0 0.0
      %2315 = vmatprep.subr.mxu0 0.0
      %2316 = vmatpush2.msra.mxu0 0.0
      %2317 = vmatprep.subr.mxu0 0.0
      %2318 = vmatpush2.msra.mxu0 0.0
      %2319 = vmatprep.subr.mxu0 0.0
      %2320 = vmatpush2.msra.mxu0 0.0
      %2321 = vmatprep.subr.mxu0 0.0
      %2322 = vmatpush2.msra.mxu0 0.0
      %2323 = vmatprep.mubr.f32.mxu0 0.0
      %2324 = vmatmul.mubr.f32.gmra.mxu0 %v2178
      %v2325 = vpop.f32.mrf.mxu0
      %v2326 = vadd.f32 0.0, %v2325
      %v2327 = vpop.f32.mrf.mxu0
      %v2328 = vadd.f32 0.0, %v2327
      %2329 = vdwg.mxu0
      %v2331 = vlaneseq
      %v2332 = vshrl.u32 %v2331, 7
      %v2333 = vsub.s32 0, %v2332
      %v2334 = vrot.slane %v1524, %v2333
      %v2335 = vlaneseq
      %v2336 = vshrl.u32 %v2335, 7
      %v2337 = vsub.s32 1, %v2336
      %v2338 = vrot.slane %v1524, %v2337
      %v2339 = vlaneseq
      %v2340 = vshrl.u32 %v2339, 7
      %v2341 = vsub.s32 2, %v2340
      %v2342 = vrot.slane %v1524, %v2341
      %v2343 = vlaneseq
      %v2344 = vshrl.u32 %v2343, 7
      %v2345 = vsub.s32 3, %v2344
      %v2346 = vrot.slane %v1524, %v2345
      %v2351 = vmul.f32 %v2334, %v2009
      %v2352 = vmul.f32 %v2338, %v2011
      %v2353 = vmul.f32 %v2342, %v2080
      %v2354 = vmul.f32 %v2346, %v2082
      %v2355 = vsub.f32 1.0, %v1524
      %v2357 = vlaneseq
      %v2358 = vshrl.u32 %v2357, 7
      %v2359 = vsub.s32 0, %v2358
      %v2360 = vrot.slane %v2355, %v2359
      %v2361 = vlaneseq
      %v2362 = vshrl.u32 %v2361, 7
      %v2363 = vsub.s32 1, %v2362
      %v2364 = vrot.slane %v2355, %v2363
      %v2365 = vlaneseq
      %v2366 = vshrl.u32 %v2365, 7
      %v2367 = vsub.s32 2, %v2366
      %v2368 = vrot.slane %v2355, %v2367
      %v2369 = vlaneseq
      %v2370 = vshrl.u32 %v2369, 7
      %v2371 = vsub.s32 3, %v2370
      %v2372 = vrot.slane %v2355, %v2371
      %v2377 = vmul.f32 %v2360, %v2255
      %v2378 = vmul.f32 %v2364, %v2257
      %v2379 = vmul.f32 %v2368, %v2326
      %v2380 = vmul.f32 %v2372, %v2328
      %v2381 = vadd.f32 %v2351, %v2377
      %v2382 = vadd.f32 %v2352, %v2378
      %v2383 = vadd.f32 %v2353, %v2379
      %v2384 = vadd.f32 %v2354, %v2380
      %v2385 = vmul.f32 %v2381, %v933
      %v2386 = vmul.f32 %v2382, %v937
      %v2387 = vmul.f32 %v2383, %v941
      %v2388 = vmul.f32 %v2384, %v945
      %v2389 = vadd.f32 %v2385, %v2386
      %v2390 = vadd.f32 %v2389, %v2387
      %v2391 = vadd.f32 %v2390, %v2388
      %2392 = vadd.xlane.f32.xlu0 %v2391
      %v2393 = vpop.xlane.xlu0 %2392
      %v2394 = vmul.f32 %v2393, 0.00390625
      %v2395 = vld [vmem:[%s13] sm:$0xff]
      %v2396 = vld [vmem:[%s14] sm:$0xff]
      %vm2397 = vcmask 64512
      %v2399 = vsel %vm2397, %v2395, 0
      %2401 = vmatprep.subr.mxu0 0.0
      %2402 = vmatpush1.msra.mxu0 0.0
      %2403 = vmatprep.subr.mxu0 0.0
      %2404 = vmatpush1.msra.mxu0 0.0
      %2405 = vmatprep.subr.mxu0 0.0
      %2406 = vmatpush1.msra.mxu0 0.0
      %2407 = vmatprep.subr.mxu0 0.0
      %2408 = vmatpush1.msra.mxu0 0.0
      %2409 = vmatprep.subr.mxu0 0.0
      %2410 = vmatpush1.msra.mxu0 0.0
      %2411 = vmatprep.subr.mxu0 0.0
      %2412 = vmatpush1.msra.mxu0 0.0
      %2413 = vmatprep.subr.mxu0 0.0
      %2414 = vmatpush1.msra.mxu0 0.0
      %2415 = vmatprep.subr.mxu0 0.0
      %2416 = vmatpush1.msra.mxu0 0.0
      %2417 = vmatprep.subr.mxu0 0.0
      %2418 = vmatpush1.msra.mxu0 0.0
      %2419 = vmatprep.subr.mxu0 0.0
      %2420 = vmatpush1.msra.mxu0 0.0
      %2421 = vmatprep.subr.mxu0 0.0
      %2422 = vmatpush1.msra.mxu0 0.0
      %2423 = vmatprep.subr.mxu0 0.0
      %2424 = vmatpush1.msra.mxu0 0.0
      %2425 = vmatprep.subr.mxu0 0.0
      %2426 = vmatpush1.msra.mxu0 0.0
      %2427 = vmatprep.subr.mxu0 0.0
      %2428 = vmatpush1.msra.mxu0 0.0
      %2429 = vmatprep.subr.mxu0 0.0
      %2430 = vmatpush1.msra.mxu0 0.0
      %2431 = vmatprep.subr.mxu0 0.0
      %2432 = vmatpush1.msra.mxu0 %v2394
      %2433 = vmatprep.subr.mxu0 0.0
      %2434 = vmatpush2.msra.mxu0 0.0
      %2435 = vmatprep.subr.mxu0 0.0
      %2436 = vmatpush2.msra.mxu0 0.0
      %2437 = vmatprep.subr.mxu0 0.0
      %2438 = vmatpush2.msra.mxu0 0.0
      %2439 = vmatprep.subr.mxu0 0.0
      %2440 = vmatpush2.msra.mxu0 0.0
      %2441 = vmatprep.subr.mxu0 0.0
      %2442 = vmatpush2.msra.mxu0 0.0
      %2443 = vmatprep.subr.mxu0 0.0
      %2444 = vmatpush2.msra.mxu0 0.0
      %2445 = vmatprep.subr.mxu0 0.0
      %2446 = vmatpush2.msra.mxu0 0.0
      %2447 = vmatprep.subr.mxu0 0.0
      %2448 = vmatpush2.msra.mxu0 0.0
      %2449 = vmatprep.subr.mxu0 0.0
      %2450 = vmatpush2.msra.mxu0 0.0
      %2451 = vmatprep.subr.mxu0 0.0
      %2452 = vmatpush2.msra.mxu0 0.0
      %2453 = vmatprep.subr.mxu0 0.0
      %2454 = vmatpush2.msra.mxu0 0.0
      %2455 = vmatprep.subr.mxu0 0.0
      %2456 = vmatpush2.msra.mxu0 0.0
      %2457 = vmatprep.subr.mxu0 0.0
      %2458 = vmatpush2.msra.mxu0 0.0
      %2459 = vmatprep.subr.mxu0 0.0
      %2460 = vmatpush2.msra.mxu0 0.0
      %2461 = vmatprep.subr.mxu0 0.0
      %2462 = vmatpush2.msra.mxu0 0.0
      %2463 = vmatprep.subr.mxu0 0.0
      %2464 = vmatpush2.msra.mxu0 0.0
      %2465 = vmatprep.mubr.f32.mxu0 0.0
      %2466 = vmatmul.mubr.f32.gmra.mxu0 %v2399
      %v2467 = vpop.f32.mrf.mxu0
      %v2468 = vadd.f32 %v2396, %v2467
      %v2469 = vpop.f32.mrf.mxu0
      %2470 = vdwg.mxu0
      %2472 = vset.pattern.permute.xlu0 0
      %2473 = vperm.xlu0 %2472, %v2468
      %v2474 = vpop.permute.xlu0 %2473
      %v2476 = vadd.f32 %v2381, %v2474
      %v2477 = vadd.f32 %v2382, %v2474
      %v2478 = vadd.f32 %v2383, %v2474
      %v2479 = vadd.f32 %v2384, %v2474
      %v2480 = vld [vmem:[%s15] sm:$0xff]
      %2482 = vset.pattern.permute.xlu0 0
      %2483 = vperm.xlu0 %2482, %v2480
      %v2484 = vpop.permute.xlu0 %2483
      %v2486 = vmul.f32 %v2476, %v2484
      %v2487 = vmul.f32 %v2477, %v2484
      %v2488 = vmul.f32 %v2478, %v2484
      %v2489 = vmul.f32 %v2479, %v2484
      %v2490 = vld [vmem:[%s16] sm:$0xff]
      %2492 = vset.pattern.permute.xlu0 0
      %2493 = vperm.xlu0 %2492, %v2490
      %v2494 = vpop.permute.xlu0 %2493
      %v2496 = vadd.f32 %v2486, %v2494
      %v2497 = vadd.f32 %v2487, %v2494
      %v2498 = vadd.f32 %v2488, %v2494
      %v2499 = vadd.f32 %v2489, %v2494
      %v2500 = vxor.u32 %v2496, 2147483648
      %v2501 = vxor.u32 %v2497, 2147483648
      %v2502 = vxor.u32 %v2498, 2147483648
      %v2503 = vxor.u32 %v2499, 2147483648
      %v2504 = vmul.f32 %v2500, 1.442695
      %v2505 = vpow.pop %v2504
      %v2506 = vmul.f32 %v2501, 1.442695
      %v2507 = vpow.pop %v2506
      %v2508 = vmul.f32 %v2502, 1.442695
      %v2509 = vpow.pop %v2508
      %v2510 = vmul.f32 %v2503, 1.442695
      %v2511 = vpow.pop %v2510
      %v2512 = vadd.f32 %v2505, 1.0
      %v2513 = vadd.f32 %v2507, 1.0
      %v2514 = vadd.f32 %v2509, 1.0
      %v2515 = vadd.f32 %v2511, 1.0
      %v2516 = vrcp.pop %v2512
      %v2517 = vmul.f32 1.0, %v2516
      %v2518 = vrcp.pop %v2513
      %v2519 = vmul.f32 1.0, %v2518
      %v2520 = vrcp.pop %v2514
      %v2521 = vmul.f32 1.0, %v2520
      %v2522 = vrcp.pop %v2515
      %v2523 = vmul.f32 1.0, %v2522
      %v2524 = vmul.f32 %v2496, %v2517
      %v2525 = vmul.f32 %v2497, %v2519
      %v2526 = vmul.f32 %v2498, %v2521
      %v2527 = vmul.f32 %v2499, %v2523
      %v2528 = vadd.f32 %v2524, %v551
      %v2529 = vadd.f32 %v2525, %v552
      %v2530 = vadd.f32 %v2526, %v553
      %v2531 = vadd.f32 %v2527, %v554
      %2532 = vst [vmem:[%s550] sm:$0xff] %v2528
      %2533 = vst [vmem:[%s550 + $0x8] sm:$0xff] %v2529
      %2534 = vst [vmem:[%s550 + $0x10] sm:$0xff] %v2530
      %2535 = vst [vmem:[%s550 + $0x18] sm:$0xff] %v2531
      %p2536 = scmp.lt.s32.totalorder %s30, 1
      %s2537 = scalar_select %p2536, %s30, 1
      %s2538 = smul.addr %s2537, 4
      %s2539 = smul.addr %s2538, 8
      %s2540 = scalar_lea.vmem %s17, %s2539
      // Predicated region
      $region89: #{bottleneck_saconv.1} parent=87 // pred_check
        %p2541 = pneg %p410
      $region90: #{bottleneck_saconv.1} parent=87 // pred_check_branch
        %2543 = sbr.rel (%p2541) target = $region92
      $region91: #{bottleneck_saconv.1} parent=87 // pred_region
        _
      $region92: #{bottleneck_saconv.1} parent=87 // pred_fallthru
        _
    $region88: #{bottleneck_saconv.1} parent=5 // pred_fallthru
      _
    %p2544 = scmp.le.s32.totalorder 2, %s25
    // Predicated region
    $region93: #{bottleneck_saconv.1} parent=5 // pred_check
      %p2545 = pneg %p2544
    $region94: #{bottleneck_saconv.1} parent=5 // pred_check_branch
      %2547 = sbr.rel (%p2545) target = $region96
    $region95: #{bottleneck_saconv.1} parent=5 // pred_region
      %s2548 = ssub.s32 %s25, 2
      // Predicated region
      $region97: #{bottleneck_saconv.1} parent=95 // pred_check
        %p2549 = pneg %p416
      $region98: #{bottleneck_saconv.1} parent=95 // pred_check_branch
        %2551 = sbr.rel (%p2549) target = $region100
      $region99: #{bottleneck_saconv.1} parent=95 // pred_region
        %p2552 = scmp.lt.s32.totalorder %s31, 1
        %s2553 = scalar_select %p2552, %s31, 1
        %s2554 = smul.addr %s2553, 4
        %s2555 = smul.addr %s2554, 8
        %s2556 = scalar_lea.vmem %s17, %s2555
      $region100: #{bottleneck_saconv.1} parent=95 // pred_fallthru
        _
    $region96: #{bottleneck_saconv.1} parent=5 // pred_fallthru
      _
  $region6: #{bottleneck_saconv.1} parent=0 // loop_footer
    %s29 = sadd.s32 1, %s25
  $region7: #{bottleneck_saconv.1} parent=0 // loop_footer_branch
    %24 = sbr.rel target = $region3
  $region8: #{bottleneck_saconv.1} parent=0 // loop_exit
    _

</llo_original>
